<compile_context>
chip_gen: v6e
topology: v6e:2x2x1
jax: 0.10.0
libtpu: 0.0.40
codegen_flags: <defaults>
</compile_context>

<pallas_src>
import functools

import jax
import jax.numpy as jnp
from jax import lax
from jax.experimental import pallas as pl
from jax.experimental.pallas import tpu as pltpu

HIDDEN = 64      # RNN hidden size (= 2 * embedding dim)
EMBED = 32       # nn.Embedding(10, 32)
NCLASS = 10      # dense output size
LANE = 128       # TPU lane width (output padding target)


# ----------------------------- Pallas kernel ------------------------------- #
def rnn_dense_kernel(x_ref,      # (S*Bp, 64)  compute dtype, time-major flattened
                     w_ih0_ref,  # (64, 64)    compute dtype (input->hidden L0, transposed)
                     w_hh0_ref,  # (64, 64)    compute dtype (hidden->hidden L0, transposed)
                     b0_ref,     # (1, 64)     f32  (b_ih0 + b_hh0)
                     w_ih1_ref,  # (64, 64)    compute dtype (input->hidden L1, transposed)
                     w_hh1_ref,  # (64, 64)    compute dtype (hidden->hidden L1, transposed)
                     b1_ref,     # (1, 64)     f32  (b_ih1 + b_hh1)
                     w_d_ref,    # (64, 128)   compute dtype, dense weight lane-padded
                     b_d_ref,    # (1, 128)    f32, dense bias lane-padded
                     out_ref,    # (S*Bp, 128) f32
                     *, seq, batch):
    hidden = w_hh0_ref.shape[0]
    cdt = x_ref.dtype  # MXU operand dtype (f32 or bf16); accumulation stays f32

    # --- hoisted layer-0 input projection (bias folded in), kept in registers ---
    xp = (jnp.dot(x_ref[...], w_ih0_ref[...],
                  preferred_element_type=jnp.float32) + b0_ref[...])   # (S*Bp, 64) f32

    # --- hoisted bias broadcast (broadcast_in_dim is not CSE'd inside loops) ---
    b1_b = jnp.broadcast_to(b1_ref[...], (batch, hidden))

    w_hh0 = w_hh0_ref[...]
    w_ih1 = w_ih1_ref[...]
    w_hh1 = w_hh1_ref[...]

    # ---- layer-0 recurrence: serial chain is (matmul + add + tanh) per step.
    # Each step's layer-1 input projection (h0_t @ W_ih1 + b1) depends only on
    # h0_t, so it is off the layer-0 chain and gives the layer-0/layer-1
    # wavefront without any VMEM round trip.  The single .astype(cdt) per step
    # feeds both consumers (W_ih1 now, W_hh0 next step).
    h0_c = jnp.zeros((batch, hidden), cdt)
    xih1 = []
    for t in range(seq):                                   # static, fully unrolled
        xp_t = xp[t * batch:(t + 1) * batch, :]            # static, sublane-aligned slice
        h0 = jnp.tanh(xp_t + jnp.dot(h0_c, w_hh0,
                                     preferred_element_type=jnp.float32))
        h0_c = h0.astype(cdt)
        xih1.append(jnp.dot(h0_c, w_ih1,
                            preferred_element_type=jnp.float32) + b1_b)

    # ---- layer-1 recurrence: only h1_prev @ W_hh1 + add + tanh on its chain ----
    h1_c = jnp.zeros((batch, hidden), cdt)
    h1_hist = []
    for t in range(seq):
        h1 = jnp.tanh(xih1[t] + jnp.dot(h1_c, w_hh1,
                                        preferred_element_type=jnp.float32))
        h1_c = h1.astype(cdt)                               # cast once; feeds W_hh1 + dense head
        h1_hist.append(h1_c)

    # --- hoisted dense head: one matmul + one full-width (lane-dense) store ---
    h1_all = jnp.concatenate(h1_hist, axis=0)               # (S*Bp, 64), cdt
    out_ref[...] = (
        jnp.dot(h1_all, w_d_ref[...], preferred_element_type=jnp.float32)
        + b_d_ref[...]).astype(out_ref.dtype)


def run_rnn_kernel(x_flat, kp, *, seq, batch_p):
    """x_flat: (seq*batch_p, 64) time-major flattened embeddings (compute dtype)."""
    n = seq * batch_p
    csz = jnp.dtype(x_flat.dtype).itemsize

    flops = 2 * n * HIDDEN * (HIDDEN        # input projection
                              + HIDDEN      # h0 @ W_hh0
                              + HIDDEN      # h0 @ W_ih1
                              + HIDDEN      # h1 @ W_hh1
                              + LANE)       # dense head (padded to 128)
    bytes_accessed = (n * HIDDEN * csz                                   # x
                      + (4 * HIDDEN * HIDDEN + HIDDEN * LANE) * csz      # weights
                      + (2 * HIDDEN + LANE) * 4                          # biases
                      + n * LANE * 4)                                    # out
    cost = pl.CostEstimate(flops=int(flops),
                           transcendentals=int(2 * n * HIDDEN),
                           bytes_accessed=int(bytes_accessed))

    kernel = functools.partial(rnn_dense_kernel, seq=seq, batch=batch_p)
    return pl.pallas_call(
        kernel,
        out_shape=jax.ShapeDtypeStruct((n, LANE), jnp.float32),
        in_specs=[pl.BlockSpec(memory_space=pltpu.MemorySpace.VMEM)] * 9,
        out_specs=pl.BlockSpec(memory_space=pltpu.MemorySpace.VMEM),
        cost_estimate=cost,
    )(x_flat, kp["w_ih0"], kp["w_hh0"], kp["b0"],
      kp["w_ih1"], kp["w_hh1"], kp["b1"], kp["w_d"], kp["b_d"])


# ------------------------------ model wrapper ------------------------------ #
def init_params(key):
    """Deterministic synthetic parameters matching the PyTorch module shapes."""
    ks = jax.random.split(key, 11)
    u = lambda k, shape, bound: jax.random.uniform(
        k, shape, jnp.float32, minval=-bound, maxval=bound)
    hb = 1.0 / jnp.sqrt(float(HIDDEN))   # PyTorch-style 1/sqrt(hidden) bound

    return {
        "embed": jax.random.normal(ks[0], (NCLASS, EMBED), jnp.float32),
        # nn.RNN(64, 64, 2): stored transposed -> (in, out) so kernel does x @ W
        "w_ih0": u(ks[1], (HIDDEN, HIDDEN), hb),
        "w_hh0": u(ks[2], (HIDDEN, HIDDEN), hb),
        "b_ih0": u(ks[3], (HIDDEN,), hb),
        "b_hh0": u(ks[4], (HIDDEN,), hb),
        "w_ih1": u(ks[5], (HIDDEN, HIDDEN), hb),
        "w_hh1": u(ks[6], (HIDDEN, HIDDEN), hb),
        "b_ih1": u(ks[7], (HIDDEN,), hb),
        "b_hh1": u(ks[8], (HIDDEN,), hb),
        # nn.Linear(64, 10): stored transposed -> (64, 10)
        "w_dense": u(ks[9], (HIDDEN, NCLASS), hb),
        "b_dense": u(ks[10], (NCLASS,), hb),
    }


def prepare_kernel_params(params, compute_dtype=jnp.float32):
    """One-time weight prep: lane padding, bias fusion, dtype cast."""
    cdt = compute_dtype
    pad_n = LANE - NCLASS
    return {
        "embed": params["embed"],
        "w_ih0": params["w_ih0"].astype(cdt),
        "w_hh0": params["w_hh0"].astype(cdt),
        "b0": (params["b_ih0"] + params["b_hh0"]).reshape(1, HIDDEN),
        "w_ih1": params["w_ih1"].astype(cdt),
        "w_hh1": params["w_hh1"].astype(cdt),
        "b1": (params["b_ih1"] + params["b_hh1"]).reshape(1, HIDDEN),
        # dense head lane-padded 10 -> 128 so the final store is full-width
        "w_d": jnp.pad(params["w_dense"], ((0, 0), (0, pad_n))).astype(cdt),
        "b_d": jnp.pad(params["b_dense"], (0, pad_n)).reshape(1, LANE),
    }


@jax.jit
def forward(kparams, num1, num2):
    """num1, num2: int32 (batch, seq) digit sequences in [0, 10). -> (B, S, 10)."""
    embed = kparams["embed"]
    cdt = kparams["w_ih0"].dtype
    # gather directly time-major (fuses the batch_first transpose into the gather)
    e1 = jnp.take(embed, num1.T, axis=0)              # (S, B, 32)
    e2 = jnp.take(embed, num2.T, axis=0)              # (S, B, 32)
    x_tm = jnp.concatenate([e1, e2], axis=-1)         # (S, B, 64)
    S, B, F = x_tm.shape
    # pad batch to the f32 sublane multiple so every tile row is real work;
    # padded rows produce garbage that is sliced off below.
    Bp = max(8, ((B + 7) // 8) * 8)
    if Bp != B:
        x_tm = jnp.pad(x_tm, ((0, 0), (0, Bp - B), (0, 0)))
    x_flat = x_tm.reshape(S * Bp, F).astype(cdt)      # (S*Bp, 64)

    out = run_rnn_kernel(x_flat, kparams, seq=S, batch_p=Bp)   # (S*Bp, 128) f32
    out = out.reshape(S, Bp, LANE)[:, :B, :NCLASS]             # strip padding
    return jnp.transpose(out, (1, 0, 2))                       # (B, S, 10)


def forward_ref(params, num1, num2):
    """Pure-JAX reference of the same math (for correctness check)."""
    e1 = jnp.take(params["embed"], num1, axis=0)
    e2 = jnp.take(params["embed"], num2, axis=0)
    x = jnp.concatenate([e1, e2], axis=-1)            # (B, S, 64)
    B, S, _ = x.shape
    h0 = jnp.zeros((B, HIDDEN), jnp.float32)
    h1 = jnp.zeros((B, HIDDEN), jnp.float32)
    outs = []
    for t in range(S):
        x_t = x[:, t, :]
        h0 = jnp.tanh(x_t @ params["w_ih0"] + params["b_ih0"]
                      + h0 @ params["w_hh0"] + params["b_hh0"])
        h1 = jnp.tanh(h0 @ params["w_ih1"] + params["b_ih1"]
                      + h1 @ params["w_hh1"] + params["b_hh1"])
        outs.append(h1 @ params["w_dense"] + params["b_dense"])
    return jnp.stack(outs, axis=1)                    # (B, S, 10)


if __name__ == "__main__":
    key = jax.random.PRNGKey(0)
    k_param, k1, k2 = jax.random.split(key, 3)
    params = init_params(k_param)

    batch, seq = 2, 8
    num1 = jax.random.randint(k1, (batch, seq), 0, 10, dtype=jnp.int32)
    num2 = jax.random.randint(k2, (batch, seq), 0, 10, dtype=jnp.int32)

    ref = forward_ref(params, num1, num2)

    # f32 path (tight check against the pure-JAX reference)
    kp_f32 = prepare_kernel_params(params, jnp.float32)
    logits = forward(kp_f32, num1, num2)
    jax.block_until_ready(logits)
    assert logits.shape == (batch, seq, 10), logits.shape
    assert jnp.allclose(logits, ref, atol=1e-4, rtol=1e-4), (
        float(jnp.max(jnp.abs(logits - ref))))

    # bf16 MXU-operand path (v6e/v7x): matmul inputs in bf16, accumulation /
    # tanh / bias math in f32 (also the v5e-safe recipe).
    kp_bf16 = prepare_kernel_params(params, jnp.bfloat16)
    logits_bf16 = forward(kp_bf16, num1, num2)
    jax.block_until_ready(logits_bf16)
    assert logits_bf16.shape == (batch, seq, 10), logits_bf16.shape
    assert jnp.allclose(logits_bf16, ref, atol=1e-1, rtol=1e-1), (
        float(jnp.max(jnp.abs(logits_bf16 - ref))))
    # argmax must agree wherever the reference top-1 margin is comfortably
    # above the bf16 noise floor (guards against a silent bf16-path regression
    # without being flaky on near-tied logits).
    ref_sorted = jnp.sort(ref, axis=-1)
    margin = ref_sorted[..., -1] - ref_sorted[..., -2]
    confident = margin > 0.15
    argmax_match = jnp.argmax(logits_bf16, -1) == jnp.argmax(ref, -1)
    assert bool(jnp.all(jnp.where(confident, argmax_match, True))), (
        "bf16 argmax mismatch on confident positions")

    print("KERNEL_OK")
</pallas_src>

<mosaic_0001>
module attributes {stable_mosaic.version = 11 : i64} {
  func.func @rnn_dense_kernel(%arg0: memref<64x64xf32, #tpu.memory_space<vmem>>, %arg1: memref<64x64xf32, #tpu.memory_space<vmem>>, %arg2: memref<64x64xf32, #tpu.memory_space<vmem>>, %arg3: memref<1x64xf32, #tpu.memory_space<vmem>>, %arg4: memref<64x64xf32, #tpu.memory_space<vmem>>, %arg5: memref<64x64xf32, #tpu.memory_space<vmem>>, %arg6: memref<1x64xf32, #tpu.memory_space<vmem>>, %arg7: memref<64x128xf32, #tpu.memory_space<vmem>>, %arg8: memref<1x128xf32, #tpu.memory_space<vmem>>, %arg9: memref<64x128xf32, #tpu.memory_space<vmem>>) attributes {dimension_semantics = [], scalar_prefetch = 0 : i64, scratch_operands = 0 : i64, tpu.core_type = #tpu.core_type<tc>} {
    %c0 = arith.constant 0 : index
    %c0_0 = arith.constant 0 : index
    %0 = vector.load %arg0[%c0, %c0_0] : memref<64x64xf32, #tpu.memory_space<vmem>>, vector<64x64xf32>
    %c0_1 = arith.constant 0 : index
    %c0_2 = arith.constant 0 : index
    %1 = vector.load %arg1[%c0_1, %c0_2] : memref<64x64xf32, #tpu.memory_space<vmem>>, vector<64x64xf32>
    %cst = arith.constant dense<0.000000e+00> : vector<64x64xf32>
    %2 = tpu.matmul %0, %1, %cst {dimension_numbers = #tpu.dot_dimension_numbers<[1], [0], [0], [1], [0, 0, 1, 1], [], []>} : vector<64x64xf32>, vector<64x64xf32>, vector<64x64xf32> -> vector<64x64xf32>
    %c0_3 = arith.constant 0 : index
    %c0_4 = arith.constant 0 : index
    %3 = vector.load %arg3[%c0_3, %c0_4] : memref<1x64xf32, #tpu.memory_space<vmem>>, vector<1x64xf32>
    %4 = vector.broadcast %3 : vector<1x64xf32> to vector<64x64xf32>
    %5 = arith.addf %2, %4 : vector<64x64xf32>
    %c0_5 = arith.constant 0 : index
    %c0_6 = arith.constant 0 : index
    %6 = vector.load %arg6[%c0_5, %c0_6] : memref<1x64xf32, #tpu.memory_space<vmem>>, vector<1x64xf32>
    %7 = vector.shape_cast %6 : vector<1x64xf32> to vector<1x64xf32>
    %8 = vector.broadcast %7 : vector<1x64xf32> to vector<8x64xf32>
    %c0_7 = arith.constant 0 : index
    %c0_8 = arith.constant 0 : index
    %9 = vector.load %arg2[%c0_7, %c0_8] : memref<64x64xf32, #tpu.memory_space<vmem>>, vector<64x64xf32>
    %c0_9 = arith.constant 0 : index
    %c0_10 = arith.constant 0 : index
    %10 = vector.load %arg4[%c0_9, %c0_10] : memref<64x64xf32, #tpu.memory_space<vmem>>, vector<64x64xf32>
    %c0_11 = arith.constant 0 : index
    %c0_12 = arith.constant 0 : index
    %11 = vector.load %arg5[%c0_11, %c0_12] : memref<64x64xf32, #tpu.memory_space<vmem>>, vector<64x64xf32>
    %cst_13 = arith.constant 0.000000e+00 : f32
    %12 = vector.broadcast %cst_13 : f32 to vector<8x64xf32>
    %13 = vector.extract_strided_slice %5 {offsets = [0, 0], sizes = [8, 64], strides = [1, 1]} : vector<64x64xf32> to vector<8x64xf32>
    %cst_14 = arith.constant dense<0.000000e+00> : vector<8x64xf32>
    %14 = tpu.matmul %12, %9, %cst_14 {dimension_numbers = #tpu.dot_dimension_numbers<[1], [0], [0], [1], [0, 0, 1, 1], [], []>} : vector<8x64xf32>, vector<64x64xf32>, vector<8x64xf32> -> vector<8x64xf32>
    %15 = arith.addf %13, %14 : vector<8x64xf32>
    %16 = math.tanh %15 : vector<8x64xf32>
    %cst_15 = arith.constant dense<0.000000e+00> : vector<8x64xf32>
    %17 = tpu.matmul %16, %10, %cst_15 {dimension_numbers = #tpu.dot_dimension_numbers<[1], [0], [0], [1], [0, 0, 1, 1], [], []>} : vector<8x64xf32>, vector<64x64xf32>, vector<8x64xf32> -> vector<8x64xf32>
    %18 = arith.addf %17, %8 : vector<8x64xf32>
    %19 = vector.extract_strided_slice %5 {offsets = [8, 0], sizes = [8, 64], strides = [1, 1]} : vector<64x64xf32> to vector<8x64xf32>
    %cst_16 = arith.constant dense<0.000000e+00> : vector<8x64xf32>
    %20 = tpu.matmul %16, %9, %cst_16 {dimension_numbers = #tpu.dot_dimension_numbers<[1], [0], [0], [1], [0, 0, 1, 1], [], []>} : vector<8x64xf32>, vector<64x64xf32>, vector<8x64xf32> -> vector<8x64xf32>
    %21 = arith.addf %19, %20 : vector<8x64xf32>
    %22 = math.tanh %21 : vector<8x64xf32>
    %cst_17 = arith.constant dense<0.000000e+00> : vector<8x64xf32>
    %23 = tpu.matmul %22, %10, %cst_17 {dimension_numbers = #tpu.dot_dimension_numbers<[1], [0], [0], [1], [0, 0, 1, 1], [], []>} : vector<8x64xf32>, vector<64x64xf32>, vector<8x64xf32> -> vector<8x64xf32>
    %24 = arith.addf %23, %8 : vector<8x64xf32>
    %25 = vector.extract_strided_slice %5 {offsets = [16, 0], sizes = [8, 64], strides = [1, 1]} : vector<64x64xf32> to vector<8x64xf32>
    %cst_18 = arith.constant dense<0.000000e+00> : vector<8x64xf32>
    %26 = tpu.matmul %22, %9, %cst_18 {dimension_numbers = #tpu.dot_dimension_numbers<[1], [0], [0], [1], [0, 0, 1, 1], [], []>} : vector<8x64xf32>, vector<64x64xf32>, vector<8x64xf32> -> vector<8x64xf32>
    %27 = arith.addf %25, %26 : vector<8x64xf32>
    %28 = math.tanh %27 : vector<8x64xf32>
    %cst_19 = arith.constant dense<0.000000e+00> : vector<8x64xf32>
    %29 = tpu.matmul %28, %10, %cst_19 {dimension_numbers = #tpu.dot_dimension_numbers<[1], [0], [0], [1], [0, 0, 1, 1], [], []>} : vector<8x64xf32>, vector<64x64xf32>, vector<8x64xf32> -> vector<8x64xf32>
    %30 = arith.addf %29, %8 : vector<8x64xf32>
    %31 = vector.extract_strided_slice %5 {offsets = [24, 0], sizes = [8, 64], strides = [1, 1]} : vector<64x64xf32> to vector<8x64xf32>
    %cst_20 = arith.constant dense<0.000000e+00> : vector<8x64xf32>
    %32 = tpu.matmul %28, %9, %cst_20 {dimension_numbers = #tpu.dot_dimension_numbers<[1], [0], [0], [1], [0, 0, 1, 1], [], []>} : vector<8x64xf32>, vector<64x64xf32>, vector<8x64xf32> -> vector<8x64xf32>
    %33 = arith.addf %31, %32 : vector<8x64xf32>
    %34 = math.tanh %33 : vector<8x64xf32>
    %cst_21 = arith.constant dense<0.000000e+00> : vector<8x64xf32>
    %35 = tpu.matmul %34, %10, %cst_21 {dimension_numbers = #tpu.dot_dimension_numbers<[1], [0], [0], [1], [0, 0, 1, 1], [], []>} : vector<8x64xf32>, vector<64x64xf32>, vector<8x64xf32> -> vector<8x64xf32>
    %36 = arith.addf %35, %8 : vector<8x64xf32>
    %37 = vector.extract_strided_slice %5 {offsets = [32, 0], sizes = [8, 64], strides = [1, 1]} : vector<64x64xf32> to vector<8x64xf32>
    %cst_22 = arith.constant dense<0.000000e+00> : vector<8x64xf32>
    %38 = tpu.matmul %34, %9, %cst_22 {dimension_numbers = #tpu.dot_dimension_numbers<[1], [0], [0], [1], [0, 0, 1, 1], [], []>} : vector<8x64xf32>, vector<64x64xf32>, vector<8x64xf32> -> vector<8x64xf32>
    %39 = arith.addf %37, %38 : vector<8x64xf32>
    %40 = math.tanh %39 : vector<8x64xf32>
    %cst_23 = arith.constant dense<0.000000e+00> : vector<8x64xf32>
    %41 = tpu.matmul %40, %10, %cst_23 {dimension_numbers = #tpu.dot_dimension_numbers<[1], [0], [0], [1], [0, 0, 1, 1], [], []>} : vector<8x64xf32>, vector<64x64xf32>, vector<8x64xf32> -> vector<8x64xf32>
    %42 = arith.addf %41, %8 : vector<8x64xf32>
    %43 = vector.extract_strided_slice %5 {offsets = [40, 0], sizes = [8, 64], strides = [1, 1]} : vector<64x64xf32> to vector<8x64xf32>
    %cst_24 = arith.constant dense<0.000000e+00> : vector<8x64xf32>
    %44 = tpu.matmul %40, %9, %cst_24 {dimension_numbers = #tpu.dot_dimension_numbers<[1], [0], [0], [1], [0, 0, 1, 1], [], []>} : vector<8x64xf32>, vector<64x64xf32>, vector<8x64xf32> -> vector<8x64xf32>
    %45 = arith.addf %43, %44 : vector<8x64xf32>
    %46 = math.tanh %45 : vector<8x64xf32>
    %cst_25 = arith.constant dense<0.000000e+00> : vector<8x64xf32>
    %47 = tpu.matmul %46, %10, %cst_25 {dimension_numbers = #tpu.dot_dimension_numbers<[1], [0], [0], [1], [0, 0, 1, 1], [], []>} : vector<8x64xf32>, vector<64x64xf32>, vector<8x64xf32> -> vector<8x64xf32>
    %48 = arith.addf %47, %8 : vector<8x64xf32>
    %49 = vector.extract_strided_slice %5 {offsets = [48, 0], sizes = [8, 64], strides = [1, 1]} : vector<64x64xf32> to vector<8x64xf32>
    %cst_26 = arith.constant dense<0.000000e+00> : vector<8x64xf32>
    %50 = tpu.matmul %46, %9, %cst_26 {dimension_numbers = #tpu.dot_dimension_numbers<[1], [0], [0], [1], [0, 0, 1, 1], [], []>} : vector<8x64xf32>, vector<64x64xf32>, vector<8x64xf32> -> vector<8x64xf32>
    %51 = arith.addf %49, %50 : vector<8x64xf32>
    %52 = math.tanh %51 : vector<8x64xf32>
    %cst_27 = arith.constant dense<0.000000e+00> : vector<8x64xf32>
    %53 = tpu.matmul %52, %10, %cst_27 {dimension_numbers = #tpu.dot_dimension_numbers<[1], [0], [0], [1], [0, 0, 1, 1], [], []>} : vector<8x64xf32>, vector<64x64xf32>, vector<8x64xf32> -> vector<8x64xf32>
    %54 = arith.addf %53, %8 : vector<8x64xf32>
    %55 = vector.extract_strided_slice %5 {offsets = [56, 0], sizes = [8, 64], strides = [1, 1]} : vector<64x64xf32> to vector<8x64xf32>
    %cst_28 = arith.constant dense<0.000000e+00> : vector<8x64xf32>
    %56 = tpu.matmul %52, %9, %cst_28 {dimension_numbers = #tpu.dot_dimension_numbers<[1], [0], [0], [1], [0, 0, 1, 1], [], []>} : vector<8x64xf32>, vector<64x64xf32>, vector<8x64xf32> -> vector<8x64xf32>
    %57 = arith.addf %55, %56 : vector<8x64xf32>
    %58 = math.tanh %57 : vector<8x64xf32>
    %cst_29 = arith.constant dense<0.000000e+00> : vector<8x64xf32>
    %59 = tpu.matmul %58, %10, %cst_29 {dimension_numbers = #tpu.dot_dimension_numbers<[1], [0], [0], [1], [0, 0, 1, 1], [], []>} : vector<8x64xf32>, vector<64x64xf32>, vector<8x64xf32> -> vector<8x64xf32>
    %60 = arith.addf %59, %8 : vector<8x64xf32>
    %cst_30 = arith.constant 0.000000e+00 : f32
    %61 = vector.broadcast %cst_30 : f32 to vector<8x64xf32>
    %cst_31 = arith.constant dense<0.000000e+00> : vector<8x64xf32>
    %62 = tpu.matmul %61, %11, %cst_31 {dimension_numbers = #tpu.dot_dimension_numbers<[1], [0], [0], [1], [0, 0, 1, 1], [], []>} : vector<8x64xf32>, vector<64x64xf32>, vector<8x64xf32> -> vector<8x64xf32>
    %63 = arith.addf %18, %62 : vector<8x64xf32>
    %64 = math.tanh %63 : vector<8x64xf32>
    %cst_32 = arith.constant dense<0.000000e+00> : vector<8x64xf32>
    %65 = tpu.matmul %64, %11, %cst_32 {dimension_numbers = #tpu.dot_dimension_numbers<[1], [0], [0], [1], [0, 0, 1, 1], [], []>} : vector<8x64xf32>, vector<64x64xf32>, vector<8x64xf32> -> vector<8x64xf32>
    %66 = arith.addf %24, %65 : vector<8x64xf32>
    %67 = math.tanh %66 : vector<8x64xf32>
    %cst_33 = arith.constant dense<0.000000e+00> : vector<8x64xf32>
    %68 = tpu.matmul %67, %11, %cst_33 {dimension_numbers = #tpu.dot_dimension_numbers<[1], [0], [0], [1], [0, 0, 1, 1], [], []>} : vector<8x64xf32>, vector<64x64xf32>, vector<8x64xf32> -> vector<8x64xf32>
    %69 = arith.addf %30, %68 : vector<8x64xf32>
    %70 = math.tanh %69 : vector<8x64xf32>
    %cst_34 = arith.constant dense<0.000000e+00> : vector<8x64xf32>
    %71 = tpu.matmul %70, %11, %cst_34 {dimension_numbers = #tpu.dot_dimension_numbers<[1], [0], [0], [1], [0, 0, 1, 1], [], []>} : vector<8x64xf32>, vector<64x64xf32>, vector<8x64xf32> -> vector<8x64xf32>
    %72 = arith.addf %36, %71 : vector<8x64xf32>
    %73 = math.tanh %72 : vector<8x64xf32>
    %cst_35 = arith.constant dense<0.000000e+00> : vector<8x64xf32>
    %74 = tpu.matmul %73, %11, %cst_35 {dimension_numbers = #tpu.dot_dimension_numbers<[1], [0], [0], [1], [0, 0, 1, 1], [], []>} : vector<8x64xf32>, vector<64x64xf32>, vector<8x64xf32> -> vector<8x64xf32>
    %75 = arith.addf %42, %74 : vector<8x64xf32>
    %76 = math.tanh %75 : vector<8x64xf32>
    %cst_36 = arith.constant dense<0.000000e+00> : vector<8x64xf32>
    %77 = tpu.matmul %76, %11, %cst_36 {dimension_numbers = #tpu.dot_dimension_numbers<[1], [0], [0], [1], [0, 0, 1, 1], [], []>} : vector<8x64xf32>, vector<64x64xf32>, vector<8x64xf32> -> vector<8x64xf32>
    %78 = arith.addf %48, %77 : vector<8x64xf32>
    %79 = math.tanh %78 : vector<8x64xf32>
    %cst_37 = arith.constant dense<0.000000e+00> : vector<8x64xf32>
    %80 = tpu.matmul %79, %11, %cst_37 {dimension_numbers = #tpu.dot_dimension_numbers<[1], [0], [0], [1], [0, 0, 1, 1], [], []>} : vector<8x64xf32>, vector<64x64xf32>, vector<8x64xf32> -> vector<8x64xf32>
    %81 = arith.addf %54, %80 : vector<8x64xf32>
    %82 = math.tanh %81 : vector<8x64xf32>
    %cst_38 = arith.constant dense<0.000000e+00> : vector<8x64xf32>
    %83 = tpu.matmul %82, %11, %cst_38 {dimension_numbers = #tpu.dot_dimension_numbers<[1], [0], [0], [1], [0, 0, 1, 1], [], []>} : vector<8x64xf32>, vector<64x64xf32>, vector<8x64xf32> -> vector<8x64xf32>
    %84 = arith.addf %60, %83 : vector<8x64xf32>
    %85 = math.tanh %84 : vector<8x64xf32>
    %86 = tpu.concatenate %64, %67, %70, %73, %76, %79, %82, %85 in 0 : vector<8x64xf32>, vector<8x64xf32>, vector<8x64xf32>, vector<8x64xf32>, vector<8x64xf32>, vector<8x64xf32>, vector<8x64xf32>, vector<8x64xf32> -> vector<64x64xf32>
    %c0_39 = arith.constant 0 : index
    %c0_40 = arith.constant 0 : index
    %87 = vector.load %arg7[%c0_39, %c0_40] : memref<64x128xf32, #tpu.memory_space<vmem>>, vector<64x128xf32>
    %cst_41 = arith.constant dense<0.000000e+00> : vector<64x128xf32>
    %88 = tpu.matmul %86, %87, %cst_41 {dimension_numbers = #tpu.dot_dimension_numbers<[1], [0], [0], [1], [0, 0, 1, 1], [], []>} : vector<64x64xf32>, vector<64x128xf32>, vector<64x128xf32> -> vector<64x128xf32>
    %c0_42 = arith.constant 0 : index
    %c0_43 = arith.constant 0 : index
    %89 = vector.load %arg8[%c0_42, %c0_43] : memref<1x128xf32, #tpu.memory_space<vmem>>, vector<1x128xf32>
    %90 = vector.broadcast %89 : vector<1x128xf32> to vector<64x128xf32>
    %91 = arith.addf %88, %90 : vector<64x128xf32>
    %c0_44 = arith.constant 0 : index
    %c0_45 = arith.constant 0 : index
    %92 = vector.load %arg9[%c0_44, %c0_45] : memref<64x128xf32, #tpu.memory_space<vmem>>, vector<64x128xf32>
    tpu.vector_store %arg9[%c0_44, %c0_45], %91 {strides = array<i32>} : memref<64x128xf32, #tpu.memory_space<vmem>>, vector<64x128xf32>,
    return
  }
}

</mosaic_0001>

<llo_original>
// kernel: forward.1
$region0: #{forward.1}
  #allocation0 [shape = 'u32[]', space=smem, size = 0x4, offset = 0x4, fixed_abs, tag = 'smem constant byte address 0x4 - core index']
  #allocation1 [shape = 'u32[144,128]{1,0:T(1,128)}', space=vmem, size = 0x12000, scoped, tag = 'internal scratch']
  %s0 = inlined_call_operand.vmem [shape: f32[64,64], index: 0, kind: input, shape index: {}]
  %s1 = inlined_call_operand.vmem [shape: f32[64,64], index: 1, kind: input, shape index: {}]
  %s2 = inlined_call_operand.vmem [shape: f32[64,64], index: 2, kind: input, shape index: {}]
  %s3 = inlined_call_operand.vmem [shape: f32[1,64], index: 3, kind: input, shape index: {}]
  %s4 = inlined_call_operand.vmem [shape: f32[64,64], index: 4, kind: input, shape index: {}]
  %s5 = inlined_call_operand.vmem [shape: f32[64,64], index: 5, kind: input, shape index: {}]
  %s6 = inlined_call_operand.vmem [shape: f32[1,64], index: 6, kind: input, shape index: {}]
  %s7 = inlined_call_operand.vmem [shape: f32[64,128], index: 7, kind: input, shape index: {}]
  %s8 = inlined_call_operand.vmem [shape: f32[1,128], index: 8, kind: input, shape index: {}]
  %s9 = inlined_call_operand.vmem [shape: f32[64,128], index: 9, kind: output, shape index: {}]
  %s10 = sld [smem:[#allocation0]]
  $region46: #{forward.1} parent=0
    _
  %s12 = ssub.s32 1, %s10
  %s13 = scalar_select 0, %s12, %s10
  // Predicated region
  $region2: #{forward.1} parent=0 // pred_check
    _
  $region3: #{forward.1} parent=0 // pred_check_branch
    %15 = sbr.rel (0) target = $region5
  $region4: #{forward.1} parent=0 // pred_region
    _
  $region5: #{forward.1} parent=0 // pred_fallthru
    _
  // Predicated region
  $region6: #{forward.1} parent=0 // pred_check
    _
  $region7: #{forward.1} parent=0 // pred_check_branch
    %17 = sbr.rel (0) target = $region9
  $region8: #{forward.1} parent=0 // pred_region
    _
  $region9: #{forward.1} parent=0 // pred_fallthru
    _
  // Predicated region
  $region10: #{forward.1} parent=0 // pred_check
    _
  $region11: #{forward.1} parent=0 // pred_check_branch
    %19 = sbr.rel (0) target = $region13
  $region12: #{forward.1} parent=0 // pred_region
    _
  $region13: #{forward.1} parent=0 // pred_fallthru
    _
  // Predicated region
  $region14: #{forward.1} parent=0 // pred_check
    _
  $region15: #{forward.1} parent=0 // pred_check_branch
    %21 = sbr.rel (0) target = $region17
  $region16: #{forward.1} parent=0 // pred_region
    _
  $region17: #{forward.1} parent=0 // pred_fallthru
    _
  // Predicated region
  $region18: #{forward.1} parent=0 // pred_check
    _
  $region19: #{forward.1} parent=0 // pred_check_branch
    %23 = sbr.rel (0) target = $region21
  $region20: #{forward.1} parent=0 // pred_region
    _
  $region21: #{forward.1} parent=0 // pred_fallthru
    _
  // Predicated region
  $region22: #{forward.1} parent=0 // pred_check
    _
  $region23: #{forward.1} parent=0 // pred_check_branch
    %25 = sbr.rel (0) target = $region25
  $region24: #{forward.1} parent=0 // pred_region
    _
  $region25: #{forward.1} parent=0 // pred_fallthru
    _
  // Predicated region
  $region26: #{forward.1} parent=0 // pred_check
    _
  $region27: #{forward.1} parent=0 // pred_check_branch
    %27 = sbr.rel (0) target = $region29
  $region28: #{forward.1} parent=0 // pred_region
    _
  $region29: #{forward.1} parent=0 // pred_fallthru
    _
  // Predicated region
  $region30: #{forward.1} parent=0 // pred_check
    _
  $region31: #{forward.1} parent=0 // pred_check_branch
    %29 = sbr.rel (0) target = $region33
  $region32: #{forward.1} parent=0 // pred_region
    _
  $region33: #{forward.1} parent=0 // pred_fallthru
    _
  // Predicated region
  $region34: #{forward.1} parent=0 // pred_check
    _
  $region35: #{forward.1} parent=0 // pred_check_branch
    %31 = sbr.rel (0) target = $region37
  $region36: #{forward.1} parent=0 // pred_region
    _
  $region37: #{forward.1} parent=0 // pred_fallthru
    _
  %v32 = vld [vmem:[%s0] sm:$0xff]
  %v33 = vld [vmem:[%s0 + $0x8] sm:$0xff]
  %v34 = vld [vmem:[%s0 + $0x10] sm:$0xff]
  %v35 = vld [vmem:[%s0 + $0x18] sm:$0xff]
  %v36 = vld [vmem:[%s0 + $0x20] sm:$0xff]
  %v37 = vld [vmem:[%s0 + $0x28] sm:$0xff]
  %v38 = vld [vmem:[%s0 + $0x30] sm:$0xff]
  %v39 = vld [vmem:[%s0 + $0x38] sm:$0xff]
  %v40 = vld [vmem:[%s1] sm:$0xff]
  %v41 = vld [vmem:[%s1 + $0x8] sm:$0xff]
  %v42 = vld [vmem:[%s1 + $0x10] sm:$0xff]
  %v43 = vld [vmem:[%s1 + $0x18] sm:$0xff]
  %v44 = vld [vmem:[%s1 + $0x20] sm:$0xff]
  %v45 = vld [vmem:[%s1 + $0x28] sm:$0xff]
  %v46 = vld [vmem:[%s1 + $0x30] sm:$0xff]
  %v47 = vld [vmem:[%s1 + $0x38] sm:$0xff]
  %v48 = vld [vmem:[%s3] sm:$0x1]
  %v50 = vlaneseq
  %v51 = vshrl.u32 %v50, 7
  %v52 = vsub.s32 0, %v51
  %v53 = vrot.slane %v48, %v52
  %vm55 = vcmask 523264
  %v57 = vsel %vm55, %v32, 0
  %v60 = vsel %vm55, %v33, 0
  %v63 = vsel %vm55, %v34, 0
  %v66 = vsel %vm55, %v35, 0
  %v69 = vsel %vm55, %v36, 0
  %v72 = vsel %vm55, %v37, 0
  %v75 = vsel %vm55, %v38, 0
  %v78 = vsel %vm55, %v39, 0
  %80 = vmatprep.subr.mxu0 0.0
  %81 = vmatpush1.msra.mxu0 0.0
  %82 = vmatprep.subr.mxu0 0.0
  %83 = vmatpush1.msra.mxu0 0.0
  %84 = vmatprep.subr.mxu0 0.0
  %85 = vmatpush1.msra.mxu0 0.0
  %86 = vmatprep.subr.mxu0 0.0
  %87 = vmatpush1.msra.mxu0 0.0
  %88 = vmatprep.subr.mxu0 0.0
  %89 = vmatpush1.msra.mxu0 0.0
  %90 = vmatprep.subr.mxu0 0.0
  %91 = vmatpush1.msra.mxu0 0.0
  %92 = vmatprep.subr.mxu0 0.0
  %93 = vmatpush1.msra.mxu0 0.0
  %94 = vmatprep.subr.mxu0 0.0
  %95 = vmatpush1.msra.mxu0 0.0
  %96 = vmatprep.subr.mxu0 0.0
  %97 = vmatpush1.msra.mxu0 %v47
  %98 = vmatprep.subr.mxu0 0.0
  %99 = vmatpush1.msra.mxu0 %v46
  %100 = vmatprep.subr.mxu0 0.0
  %101 = vmatpush1.msra.mxu0 %v45
  %102 = vmatprep.subr.mxu0 0.0
  %103 = vmatpush1.msra.mxu0 %v44
  %104 = vmatprep.subr.mxu0 0.0
  %105 = vmatpush1.msra.mxu0 %v43
  %106 = vmatprep.subr.mxu0 0.0
  %107 = vmatpush1.msra.mxu0 %v42
  %108 = vmatprep.subr.mxu0 0.0
  %109 = vmatpush1.msra.mxu0 %v41
  %110 = vmatprep.subr.mxu0 0.0
  %111 = vmatpush1.msra.mxu0 %v40
  %112 = vmatprep.subr.mxu0 0.0
  %113 = vmatpush2.msra.mxu0 0.0
  %114 = vmatprep.subr.mxu0 0.0
  %115 = vmatpush2.msra.mxu0 0.0
  %116 = vmatprep.subr.mxu0 0.0
  %117 = vmatpush2.msra.mxu0 0.0
  %118 = vmatprep.subr.mxu0 0.0
  %119 = vmatpush2.msra.mxu0 0.0
  %120 = vmatprep.subr.mxu0 0.0
  %121 = vmatpush2.msra.mxu0 0.0
  %122 = vmatprep.subr.mxu0 0.0
  %123 = vmatpush2.msra.mxu0 0.0
  %124 = vmatprep.subr.mxu0 0.0
  %125 = vmatpush2.msra.mxu0 0.0
  %126 = vmatprep.subr.mxu0 0.0
  %127 = vmatpush2.msra.mxu0 0.0
  %128 = vmatprep.subr.mxu0 0.0
  %129 = vmatpush2.msra.mxu0 0.0
  %130 = vmatprep.subr.mxu0 0.0
  %131 = vmatpush2.msra.mxu0 0.0
  %132 = vmatprep.subr.mxu0 0.0
  %133 = vmatpush2.msra.mxu0 0.0
  %134 = vmatprep.subr.mxu0 0.0
  %135 = vmatpush2.msra.mxu0 0.0
  %136 = vmatprep.subr.mxu0 0.0
  %137 = vmatpush2.msra.mxu0 0.0
  %138 = vmatprep.subr.mxu0 0.0
  %139 = vmatpush2.msra.mxu0 0.0
  %140 = vmatprep.subr.mxu0 0.0
  %141 = vmatpush2.msra.mxu0 0.0
  %142 = vmatprep.subr.mxu0 0.0
  %143 = vmatpush2.msra.mxu0 0.0
  %144 = vmatprep.mubr.f32.mxu0 0.0
  %145 = vmatmul.mubr.f32.gmra.mxu0 %v57
  %v146 = vpop.f32.mrf.mxu0
  %v147 = vadd.f32 %v53, %v146
  %v148 = vpop.f32.mrf.mxu0
  %149 = vmatprep.mubr.f32.mxu0 0.0
  %150 = vmatmul.mubr.f32.gmra.mxu0 %v60
  %v151 = vpop.f32.mrf.mxu0
  %v152 = vadd.f32 %v53, %v151
  %v153 = vpop.f32.mrf.mxu0
  %154 = vmatprep.mubr.f32.mxu0 0.0
  %155 = vmatmul.mubr.f32.gmra.mxu0 %v63
  %v156 = vpop.f32.mrf.mxu0
  %v157 = vadd.f32 %v53, %v156
  %v158 = vpop.f32.mrf.mxu0
  %159 = vmatprep.mubr.f32.mxu0 0.0
  %160 = vmatmul.mubr.f32.gmra.mxu0 %v66
  %v161 = vpop.f32.mrf.mxu0
  %v162 = vadd.f32 %v53, %v161
  %v163 = vpop.f32.mrf.mxu0
  %164 = vmatprep.mubr.f32.mxu0 0.0
  %165 = vmatmul.mubr.f32.gmra.mxu0 %v69
  %v166 = vpop.f32.mrf.mxu0
  %v167 = vadd.f32 %v53, %v166
  %v168 = vpop.f32.mrf.mxu0
  %169 = vmatprep.mubr.f32.mxu0 0.0
  %170 = vmatmul.mubr.f32.gmra.mxu0 %v72
  %v171 = vpop.f32.mrf.mxu0
  %v172 = vadd.f32 %v53, %v171
  %v173 = vpop.f32.mrf.mxu0
  %174 = vmatprep.mubr.f32.mxu0 0.0
  %175 = vmatmul.mubr.f32.gmra.mxu0 %v75
  %v176 = vpop.f32.mrf.mxu0
  %v177 = vadd.f32 %v53, %v176
  %v178 = vpop.f32.mrf.mxu0
  %179 = vmatprep.mubr.f32.mxu0 0.0
  %180 = vmatmul.mubr.f32.gmra.mxu0 %v78
  %v181 = vpop.f32.mrf.mxu0
  %v182 = vadd.f32 %v53, %v181
  %v183 = vpop.f32.mrf.mxu0
  %184 = vdwg.mxu0
  %v185 = vld [vmem:[%s6] sm:$0x1]
  %v187 = vlaneseq
  %v188 = vshrl.u32 %v187, 7
  %v189 = vsub.s32 0, %v188
  %v190 = vrot.slane %v185, %v189
  %v192 = vld [vmem:[%s2] sm:$0xff]
  %v193 = vld [vmem:[%s2 + $0x8] sm:$0xff]
  %v194 = vld [vmem:[%s2 + $0x10] sm:$0xff]
  %v195 = vld [vmem:[%s2 + $0x18] sm:$0xff]
  %v196 = vld [vmem:[%s2 + $0x20] sm:$0xff]
  %v197 = vld [vmem:[%s2 + $0x28] sm:$0xff]
  %v198 = vld [vmem:[%s2 + $0x30] sm:$0xff]
  %v199 = vld [vmem:[%s2 + $0x38] sm:$0xff]
  %v200 = vld [vmem:[%s4] sm:$0xff]
  %v201 = vld [vmem:[%s4 + $0x8] sm:$0xff]
  %v202 = vld [vmem:[%s4 + $0x10] sm:$0xff]
  %v203 = vld [vmem:[%s4 + $0x18] sm:$0xff]
  %v204 = vld [vmem:[%s4 + $0x20] sm:$0xff]
  %v205 = vld [vmem:[%s4 + $0x28] sm:$0xff]
  %v206 = vld [vmem:[%s4 + $0x30] sm:$0xff]
  %v207 = vld [vmem:[%s4 + $0x38] sm:$0xff]
  %v208 = vld [vmem:[%s5] sm:$0xff]
  %v209 = vld [vmem:[%s5 + $0x8] sm:$0xff]
  %v210 = vld [vmem:[%s5 + $0x10] sm:$0xff]
  %v211 = vld [vmem:[%s5 + $0x18] sm:$0xff]
  %v212 = vld [vmem:[%s5 + $0x20] sm:$0xff]
  %v213 = vld [vmem:[%s5 + $0x28] sm:$0xff]
  %v214 = vld [vmem:[%s5 + $0x30] sm:$0xff]
  %v215 = vld [vmem:[%s5 + $0x38] sm:$0xff]
  %v217 = vsel %vm55, 0.0, 0
  %219 = vmatprep.subr.mxu0 0.0
  %220 = vmatpush1.msra.mxu0 0.0
  %221 = vmatprep.subr.mxu0 0.0
  %222 = vmatpush1.msra.mxu0 0.0
  %223 = vmatprep.subr.mxu0 0.0
  %224 = vmatpush1.msra.mxu0 0.0
  %225 = vmatprep.subr.mxu0 0.0
  %226 = vmatpush1.msra.mxu0 0.0
  %227 = vmatprep.subr.mxu0 0.0
  %228 = vmatpush1.msra.mxu0 0.0
  %229 = vmatprep.subr.mxu0 0.0
  %230 = vmatpush1.msra.mxu0 0.0
  %231 = vmatprep.subr.mxu0 0.0
  %232 = vmatpush1.msra.mxu0 0.0
  %233 = vmatprep.subr.mxu0 0.0
  %234 = vmatpush1.msra.mxu0 0.0
  %235 = vmatprep.subr.mxu0 0.0
  %236 = vmatpush1.msra.mxu0 %v199
  %237 = vmatprep.subr.mxu0 0.0
  %238 = vmatpush1.msra.mxu0 %v198
  %239 = vmatprep.subr.mxu0 0.0
  %240 = vmatpush1.msra.mxu0 %v197
  %241 = vmatprep.subr.mxu0 0.0
  %242 = vmatpush1.msra.mxu0 %v196
  %243 = vmatprep.subr.mxu0 0.0
  %244 = vmatpush1.msra.mxu0 %v195
  %245 = vmatprep.subr.mxu0 0.0
  %246 = vmatpush1.msra.mxu0 %v194
  %247 = vmatprep.subr.mxu0 0.0
  %248 = vmatpush1.msra.mxu0 %v193
  %249 = vmatprep.subr.mxu0 0.0
  %250 = vmatpush1.msra.mxu0 %v192
  %251 = vmatprep.subr.mxu0 0.0
  %252 = vmatpush2.msra.mxu0 0.0
  %253 = vmatprep.subr.mxu0 0.0
  %254 = vmatpush2.msra.mxu0 0.0
  %255 = vmatprep.subr.mxu0 0.0
  %256 = vmatpush2.msra.mxu0 0.0
  %257 = vmatprep.subr.mxu0 0.0
  %258 = vmatpush2.msra.mxu0 0.0
  %259 = vmatprep.subr.mxu0 0.0
  %260 = vmatpush2.msra.mxu0 0.0
  %261 = vmatprep.subr.mxu0 0.0
  %262 = vmatpush2.msra.mxu0 0.0
  %263 = vmatprep.subr.mxu0 0.0
  %264 = vmatpush2.msra.mxu0 0.0
  %265 = vmatprep.subr.mxu0 0.0
  %266 = vmatpush2.msra.mxu0 0.0
  %267 = vmatprep.subr.mxu0 0.0
  %268 = vmatpush2.msra.mxu0 0.0
  %269 = vmatprep.subr.mxu0 0.0
  %270 = vmatpush2.msra.mxu0 0.0
  %271 = vmatprep.subr.mxu0 0.0
  %272 = vmatpush2.msra.mxu0 0.0
  %273 = vmatprep.subr.mxu0 0.0
  %274 = vmatpush2.msra.mxu0 0.0
  %275 = vmatprep.subr.mxu0 0.0
  %276 = vmatpush2.msra.mxu0 0.0
  %277 = vmatprep.subr.mxu0 0.0
  %278 = vmatpush2.msra.mxu0 0.0
  %279 = vmatprep.subr.mxu0 0.0
  %280 = vmatpush2.msra.mxu0 0.0
  %281 = vmatprep.subr.mxu0 0.0
  %282 = vmatpush2.msra.mxu0 0.0
  %283 = vmatprep.mubr.f32.mxu0 0.0
  %284 = vmatmul.mubr.f32.gmra.mxu0 %v217
  %v285 = vpop.f32.mrf.mxu0
  %v286 = vadd.f32 0.0, %v285
  %v287 = vpop.f32.mrf.mxu0
  %288 = vdwg.mxu0
  %v289 = vadd.f32 %v147, %v286
  %v290 = vtanh.pop %v289
  %v292 = vsel %vm55, %v290, 0
  %294 = vmatprep.subr.mxu0 0.0
  %295 = vmatpush1.msra.mxu0 0.0
  %296 = vmatprep.subr.mxu0 0.0
  %297 = vmatpush1.msra.mxu0 0.0
  %298 = vmatprep.subr.mxu0 0.0
  %299 = vmatpush1.msra.mxu0 0.0
  %300 = vmatprep.subr.mxu0 0.0
  %301 = vmatpush1.msra.mxu0 0.0
  %302 = vmatprep.subr.mxu0 0.0
  %303 = vmatpush1.msra.mxu0 0.0
  %304 = vmatprep.subr.mxu0 0.0
  %305 = vmatpush1.msra.mxu0 0.0
  %306 = vmatprep.subr.mxu0 0.0
  %307 = vmatpush1.msra.mxu0 0.0
  %308 = vmatprep.subr.mxu0 0.0
  %309 = vmatpush1.msra.mxu0 0.0
  %310 = vmatprep.subr.mxu0 0.0
  %311 = vmatpush1.msra.mxu0 %v207
  %312 = vmatprep.subr.mxu0 0.0
  %313 = vmatpush1.msra.mxu0 %v206
  %314 = vmatprep.subr.mxu0 0.0
  %315 = vmatpush1.msra.mxu0 %v205
  %316 = vmatprep.subr.mxu0 0.0
  %317 = vmatpush1.msra.mxu0 %v204
  %318 = vmatprep.subr.mxu0 0.0
  %319 = vmatpush1.msra.mxu0 %v203
  %320 = vmatprep.subr.mxu0 0.0
  %321 = vmatpush1.msra.mxu0 %v202
  %322 = vmatprep.subr.mxu0 0.0
  %323 = vmatpush1.msra.mxu0 %v201
  %324 = vmatprep.subr.mxu0 0.0
  %325 = vmatpush1.msra.mxu0 %v200
  %326 = vmatprep.subr.mxu0 0.0
  %327 = vmatpush2.msra.mxu0 0.0
  %328 = vmatprep.subr.mxu0 0.0
  %329 = vmatpush2.msra.mxu0 0.0
  %330 = vmatprep.subr.mxu0 0.0
  %331 = vmatpush2.msra.mxu0 0.0
  %332 = vmatprep.subr.mxu0 0.0
  %333 = vmatpush2.msra.mxu0 0.0
  %334 = vmatprep.subr.mxu0 0.0
  %335 = vmatpush2.msra.mxu0 0.0
  %336 = vmatprep.subr.mxu0 0.0
  %337 = vmatpush2.msra.mxu0 0.0
  %338 = vmatprep.subr.mxu0 0.0
  %339 = vmatpush2.msra.mxu0 0.0
  %340 = vmatprep.subr.mxu0 0.0
  %341 = vmatpush2.msra.mxu0 0.0
  %342 = vmatprep.subr.mxu0 0.0
  %343 = vmatpush2.msra.mxu0 0.0
  %344 = vmatprep.subr.mxu0 0.0
  %345 = vmatpush2.msra.mxu0 0.0
  %346 = vmatprep.subr.mxu0 0.0
  %347 = vmatpush2.msra.mxu0 0.0
  %348 = vmatprep.subr.mxu0 0.0
  %349 = vmatpush2.msra.mxu0 0.0
  %350 = vmatprep.subr.mxu0 0.0
  %351 = vmatpush2.msra.mxu0 0.0
  %352 = vmatprep.subr.mxu0 0.0
  %353 = vmatpush2.msra.mxu0 0.0
  %354 = vmatprep.subr.mxu0 0.0
  %355 = vmatpush2.msra.mxu0 0.0
  %356 = vmatprep.subr.mxu0 0.0
  %357 = vmatpush2.msra.mxu0 0.0
  %358 = vmatprep.mubr.f32.mxu0 0.0
  %359 = vmatmul.mubr.f32.gmra.mxu0 %v292
  %v360 = vpop.f32.mrf.mxu0
  %v361 = vadd.f32 %v190, %v360
  %v362 = vpop.f32.mrf.mxu0
  %363 = vdwg.mxu0
  %364 = vmatprep.subr.mxu0 0.0
  %365 = vmatpush1.msra.mxu0 0.0
  %366 = vmatprep.subr.mxu0 0.0
  %367 = vmatpush1.msra.mxu0 0.0
  %368 = vmatprep.subr.mxu0 0.0
  %369 = vmatpush1.msra.mxu0 0.0
  %370 = vmatprep.subr.mxu0 0.0
  %371 = vmatpush1.msra.mxu0 0.0
  %372 = vmatprep.subr.mxu0 0.0
  %373 = vmatpush1.msra.mxu0 0.0
  %374 = vmatprep.subr.mxu0 0.0
  %375 = vmatpush1.msra.mxu0 0.0
  %376 = vmatprep.subr.mxu0 0.0
  %377 = vmatpush1.msra.mxu0 0.0
  %378 = vmatprep.subr.mxu0 0.0
  %379 = vmatpush1.msra.mxu0 0.0
  %380 = vmatprep.subr.mxu0 0.0
  %381 = vmatpush1.msra.mxu0 %v199
  %382 = vmatprep.subr.mxu0 0.0
  %383 = vmatpush1.msra.mxu0 %v198
  %384 = vmatprep.subr.mxu0 0.0
  %385 = vmatpush1.msra.mxu0 %v197
  %386 = vmatprep.subr.mxu0 0.0
  %387 = vmatpush1.msra.mxu0 %v196
  %388 = vmatprep.subr.mxu0 0.0
  %389 = vmatpush1.msra.mxu0 %v195
  %390 = vmatprep.subr.mxu0 0.0
  %391 = vmatpush1.msra.mxu0 %v194
  %392 = vmatprep.subr.mxu0 0.0
  %393 = vmatpush1.msra.mxu0 %v193
  %394 = vmatprep.subr.mxu0 0.0
  %395 = vmatpush1.msra.mxu0 %v192
  %396 = vmatprep.subr.mxu0 0.0
  %397 = vmatpush2.msra.mxu0 0.0
  %398 = vmatprep.subr.mxu0 0.0
  %399 = vmatpush2.msra.mxu0 0.0
  %400 = vmatprep.subr.mxu0 0.0
  %401 = vmatpush2.msra.mxu0 0.0
  %402 = vmatprep.subr.mxu0 0.0
  %403 = vmatpush2.msra.mxu0 0.0
  %404 = vmatprep.subr.mxu0 0.0
  %405 = vmatpush2.msra.mxu0 0.0
  %406 = vmatprep.subr.mxu0 0.0
  %407 = vmatpush2.msra.mxu0 0.0
  %408 = vmatprep.subr.mxu0 0.0
  %409 = vmatpush2.msra.mxu0 0.0
  %410 = vmatprep.subr.mxu0 0.0
  %411 = vmatpush2.msra.mxu0 0.0
  %412 = vmatprep.subr.mxu0 0.0
  %413 = vmatpush2.msra.mxu0 0.0
  %414 = vmatprep.subr.mxu0 0.0
  %415 = vmatpush2.msra.mxu0 0.0
  %416 = vmatprep.subr.mxu0 0.0
  %417 = vmatpush2.msra.mxu0 0.0
  %418 = vmatprep.subr.mxu0 0.0
  %419 = vmatpush2.msra.mxu0 0.0
  %420 = vmatprep.subr.mxu0 0.0
  %421 = vmatpush2.msra.mxu0 0.0
  %422 = vmatprep.subr.mxu0 0.0
  %423 = vmatpush2.msra.mxu0 0.0
  %424 = vmatprep.subr.mxu0 0.0
  %425 = vmatpush2.msra.mxu0 0.0
  %426 = vmatprep.subr.mxu0 0.0
  %427 = vmatpush2.msra.mxu0 0.0
  %428 = vmatprep.mubr.f32.mxu0 0.0
  %429 = vmatmul.mubr.f32.gmra.mxu0 %v292
  %v430 = vpop.f32.mrf.mxu0
  %v431 = vadd.f32 0.0, %v430
  %v432 = vpop.f32.mrf.mxu0
  %433 = vdwg.mxu0
  %v434 = vadd.f32 %v152, %v431
  %v435 = vtanh.pop %v434
  %v437 = vsel %vm55, %v435, 0
  %439 = vmatprep.subr.mxu0 0.0
  %440 = vmatpush1.msra.mxu0 0.0
  %441 = vmatprep.subr.mxu0 0.0
  %442 = vmatpush1.msra.mxu0 0.0
  %443 = vmatprep.subr.mxu0 0.0
  %444 = vmatpush1.msra.mxu0 0.0
  %445 = vmatprep.subr.mxu0 0.0
  %446 = vmatpush1.msra.mxu0 0.0
  %447 = vmatprep.subr.mxu0 0.0
  %448 = vmatpush1.msra.mxu0 0.0
  %449 = vmatprep.subr.mxu0 0.0
  %450 = vmatpush1.msra.mxu0 0.0
  %451 = vmatprep.subr.mxu0 0.0
  %452 = vmatpush1.msra.mxu0 0.0
  %453 = vmatprep.subr.mxu0 0.0
  %454 = vmatpush1.msra.mxu0 0.0
  %455 = vmatprep.subr.mxu0 0.0
  %456 = vmatpush1.msra.mxu0 %v207
  %457 = vmatprep.subr.mxu0 0.0
  %458 = vmatpush1.msra.mxu0 %v206
  %459 = vmatprep.subr.mxu0 0.0
  %460 = vmatpush1.msra.mxu0 %v205
  %461 = vmatprep.subr.mxu0 0.0
  %462 = vmatpush1.msra.mxu0 %v204
  %463 = vmatprep.subr.mxu0 0.0
  %464 = vmatpush1.msra.mxu0 %v203
  %465 = vmatprep.subr.mxu0 0.0
  %466 = vmatpush1.msra.mxu0 %v202
  %467 = vmatprep.subr.mxu0 0.0
  %468 = vmatpush1.msra.mxu0 %v201
  %469 = vmatprep.subr.mxu0 0.0
  %470 = vmatpush1.msra.mxu0 %v200
  %471 = vmatprep.subr.mxu0 0.0
  %472 = vmatpush2.msra.mxu0 0.0
  %473 = vmatprep.subr.mxu0 0.0
  %474 = vmatpush2.msra.mxu0 0.0
  %475 = vmatprep.subr.mxu0 0.0
  %476 = vmatpush2.msra.mxu0 0.0
  %477 = vmatprep.subr.mxu0 0.0
  %478 = vmatpush2.msra.mxu0 0.0
  %479 = vmatprep.subr.mxu0 0.0
  %480 = vmatpush2.msra.mxu0 0.0
  %481 = vmatprep.subr.mxu0 0.0
  %482 = vmatpush2.msra.mxu0 0.0
  %483 = vmatprep.subr.mxu0 0.0
  %484 = vmatpush2.msra.mxu0 0.0
  %485 = vmatprep.subr.mxu0 0.0
  %486 = vmatpush2.msra.mxu0 0.0
  %487 = vmatprep.subr.mxu0 0.0
  %488 = vmatpush2.msra.mxu0 0.0
  %489 = vmatprep.subr.mxu0 0.0
  %490 = vmatpush2.msra.mxu0 0.0
  %491 = vmatprep.subr.mxu0 0.0
  %492 = vmatpush2.msra.mxu0 0.0
  %493 = vmatprep.subr.mxu0 0.0
  %494 = vmatpush2.msra.mxu0 0.0
  %495 = vmatprep.subr.mxu0 0.0
  %496 = vmatpush2.msra.mxu0 0.0
  %497 = vmatprep.subr.mxu0 0.0
  %498 = vmatpush2.msra.mxu0 0.0
  %499 = vmatprep.subr.mxu0 0.0
  %500 = vmatpush2.msra.mxu0 0.0
  %501 = vmatprep.subr.mxu0 0.0
  %502 = vmatpush2.msra.mxu0 0.0
  %503 = vmatprep.mubr.f32.mxu0 0.0
  %504 = vmatmul.mubr.f32.gmra.mxu0 %v437
  %v505 = vpop.f32.mrf.mxu0
  %v506 = vadd.f32 %v190, %v505
  %v507 = vpop.f32.mrf.mxu0
  %508 = vdwg.mxu0
  %509 = vmatprep.subr.mxu0 0.0
  %510 = vmatpush1.msra.mxu0 0.0
  %511 = vmatprep.subr.mxu0 0.0
  %512 = vmatpush1.msra.mxu0 0.0
  %513 = vmatprep.subr.mxu0 0.0
  %514 = vmatpush1.msra.mxu0 0.0
  %515 = vmatprep.subr.mxu0 0.0
  %516 = vmatpush1.msra.mxu0 0.0
  %517 = vmatprep.subr.mxu0 0.0
  %518 = vmatpush1.msra.mxu0 0.0
  %519 = vmatprep.subr.mxu0 0.0
  %520 = vmatpush1.msra.mxu0 0.0
  %521 = vmatprep.subr.mxu0 0.0
  %522 = vmatpush1.msra.mxu0 0.0
  %523 = vmatprep.subr.mxu0 0.0
  %524 = vmatpush1.msra.mxu0 0.0
  %525 = vmatprep.subr.mxu0 0.0
  %526 = vmatpush1.msra.mxu0 %v199
  %527 = vmatprep.subr.mxu0 0.0
  %528 = vmatpush1.msra.mxu0 %v198
  %529 = vmatprep.subr.mxu0 0.0
  %530 = vmatpush1.msra.mxu0 %v197
  %531 = vmatprep.subr.mxu0 0.0
  %532 = vmatpush1.msra.mxu0 %v196
  %533 = vmatprep.subr.mxu0 0.0
  %534 = vmatpush1.msra.mxu0 %v195
  %535 = vmatprep.subr.mxu0 0.0
  %536 = vmatpush1.msra.mxu0 %v194
  %537 = vmatprep.subr.mxu0 0.0
  %538 = vmatpush1.msra.mxu0 %v193
  %539 = vmatprep.subr.mxu0 0.0
  %540 = vmatpush1.msra.mxu0 %v192
  %541 = vmatprep.subr.mxu0 0.0
  %542 = vmatpush2.msra.mxu0 0.0
  %543 = vmatprep.subr.mxu0 0.0
  %544 = vmatpush2.msra.mxu0 0.0
  %545 = vmatprep.subr.mxu0 0.0
  %546 = vmatpush2.msra.mxu0 0.0
  %547 = vmatprep.subr.mxu0 0.0
  %548 = vmatpush2.msra.mxu0 0.0
  %549 = vmatprep.subr.mxu0 0.0
  %550 = vmatpush2.msra.mxu0 0.0
  %551 = vmatprep.subr.mxu0 0.0
  %552 = vmatpush2.msra.mxu0 0.0
  %553 = vmatprep.subr.mxu0 0.0
  %554 = vmatpush2.msra.mxu0 0.0
  %555 = vmatprep.subr.mxu0 0.0
  %556 = vmatpush2.msra.mxu0 0.0
  %557 = vmatprep.subr.mxu0 0.0
  %558 = vmatpush2.msra.mxu0 0.0
  %559 = vmatprep.subr.mxu0 0.0
  %560 = vmatpush2.msra.mxu0 0.0
  %561 = vmatprep.subr.mxu0 0.0
  %562 = vmatpush2.msra.mxu0 0.0
  %563 = vmatprep.subr.mxu0 0.0
  %564 = vmatpush2.msra.mxu0 0.0
  %565 = vmatprep.subr.mxu0 0.0
  %566 = vmatpush2.msra.mxu0 0.0
  %567 = vmatprep.subr.mxu0 0.0
  %568 = vmatpush2.msra.mxu0 0.0
  %569 = vmatprep.subr.mxu0 0.0
  %570 = vmatpush2.msra.mxu0 0.0
  %571 = vmatprep.subr.mxu0 0.0
  %572 = vmatpush2.msra.mxu0 0.0
  %573 = vmatprep.mubr.f32.mxu0 0.0
  %574 = vmatmul.mubr.f32.gmra.mxu0 %v437
  %v575 = vpop.f32.mrf.mxu0
  %v576 = vadd.f32 0.0, %v575
  %v577 = vpop.f32.mrf.mxu0
  %578 = vdwg.mxu0
  %v579 = vadd.f32 %v157, %v576
  %v580 = vtanh.pop %v579
  %v582 = vsel %vm55, %v580, 0
  %584 = vmatprep.subr.mxu0 0.0
  %585 = vmatpush1.msra.mxu0 0.0
  %586 = vmatprep.subr.mxu0 0.0
  %587 = vmatpush1.msra.mxu0 0.0
  %588 = vmatprep.subr.mxu0 0.0
  %589 = vmatpush1.msra.mxu0 0.0
  %590 = vmatprep.subr.mxu0 0.0
  %591 = vmatpush1.msra.mxu0 0.0
  %592 = vmatprep.subr.mxu0 0.0
  %593 = vmatpush1.msra.mxu0 0.0
  %594 = vmatprep.subr.mxu0 0.0
  %595 = vmatpush1.msra.mxu0 0.0
  %596 = vmatprep.subr.mxu0 0.0
  %597 = vmatpush1.msra.mxu0 0.0
  %598 = vmatprep.subr.mxu0 0.0
  %599 = vmatpush1.msra.mxu0 0.0
  %600 = vmatprep.subr.mxu0 0.0
  %601 = vmatpush1.msra.mxu0 %v207
  %602 = vmatprep.subr.mxu0 0.0
  %603 = vmatpush1.msra.mxu0 %v206
  %604 = vmatprep.subr.mxu0 0.0
  %605 = vmatpush1.msra.mxu0 %v205
  %606 = vmatprep.subr.mxu0 0.0
  %607 = vmatpush1.msra.mxu0 %v204
  %608 = vmatprep.subr.mxu0 0.0
  %609 = vmatpush1.msra.mxu0 %v203
  %610 = vmatprep.subr.mxu0 0.0
  %611 = vmatpush1.msra.mxu0 %v202
  %612 = vmatprep.subr.mxu0 0.0
  %613 = vmatpush1.msra.mxu0 %v201
  %614 = vmatprep.subr.mxu0 0.0
  %615 = vmatpush1.msra.mxu0 %v200
  %616 = vmatprep.subr.mxu0 0.0
  %617 = vmatpush2.msra.mxu0 0.0
  %618 = vmatprep.subr.mxu0 0.0
  %619 = vmatpush2.msra.mxu0 0.0
  %620 = vmatprep.subr.mxu0 0.0
  %621 = vmatpush2.msra.mxu0 0.0
  %622 = vmatprep.subr.mxu0 0.0
  %623 = vmatpush2.msra.mxu0 0.0
  %624 = vmatprep.subr.mxu0 0.0
  %625 = vmatpush2.msra.mxu0 0.0
  %626 = vmatprep.subr.mxu0 0.0
  %627 = vmatpush2.msra.mxu0 0.0
  %628 = vmatprep.subr.mxu0 0.0
  %629 = vmatpush2.msra.mxu0 0.0
  %630 = vmatprep.subr.mxu0 0.0
  %631 = vmatpush2.msra.mxu0 0.0
  %632 = vmatprep.subr.mxu0 0.0
  %633 = vmatpush2.msra.mxu0 0.0
  %634 = vmatprep.subr.mxu0 0.0
  %635 = vmatpush2.msra.mxu0 0.0
  %636 = vmatprep.subr.mxu0 0.0
  %637 = vmatpush2.msra.mxu0 0.0
  %638 = vmatprep.subr.mxu0 0.0
  %639 = vmatpush2.msra.mxu0 0.0
  %640 = vmatprep.subr.mxu0 0.0
  %641 = vmatpush2.msra.mxu0 0.0
  %642 = vmatprep.subr.mxu0 0.0
  %643 = vmatpush2.msra.mxu0 0.0
  %644 = vmatprep.subr.mxu0 0.0
  %645 = vmatpush2.msra.mxu0 0.0
  %646 = vmatprep.subr.mxu0 0.0
  %647 = vmatpush2.msra.mxu0 0.0
  %648 = vmatprep.mubr.f32.mxu0 0.0
  %649 = vmatmul.mubr.f32.gmra.mxu0 %v582
  %v650 = vpop.f32.mrf.mxu0
  %v651 = vadd.f32 %v190, %v650
  %v652 = vpop.f32.mrf.mxu0
  %653 = vdwg.mxu0
  %654 = vmatprep.subr.mxu0 0.0
  %655 = vmatpush1.msra.mxu0 0.0
  %656 = vmatprep.subr.mxu0 0.0
  %657 = vmatpush1.msra.mxu0 0.0
  %658 = vmatprep.subr.mxu0 0.0
  %659 = vmatpush1.msra.mxu0 0.0
  %660 = vmatprep.subr.mxu0 0.0
  %661 = vmatpush1.msra.mxu0 0.0
  %662 = vmatprep.subr.mxu0 0.0
  %663 = vmatpush1.msra.mxu0 0.0
  %664 = vmatprep.subr.mxu0 0.0
  %665 = vmatpush1.msra.mxu0 0.0
  %666 = vmatprep.subr.mxu0 0.0
  %667 = vmatpush1.msra.mxu0 0.0
  %668 = vmatprep.subr.mxu0 0.0
  %669 = vmatpush1.msra.mxu0 0.0
  %670 = vmatprep.subr.mxu0 0.0
  %671 = vmatpush1.msra.mxu0 %v199
  %672 = vmatprep.subr.mxu0 0.0
  %673 = vmatpush1.msra.mxu0 %v198
  %674 = vmatprep.subr.mxu0 0.0
  %675 = vmatpush1.msra.mxu0 %v197
  %676 = vmatprep.subr.mxu0 0.0
  %677 = vmatpush1.msra.mxu0 %v196
  %678 = vmatprep.subr.mxu0 0.0
  %679 = vmatpush1.msra.mxu0 %v195
  %680 = vmatprep.subr.mxu0 0.0
  %681 = vmatpush1.msra.mxu0 %v194
  %682 = vmatprep.subr.mxu0 0.0
  %683 = vmatpush1.msra.mxu0 %v193
  %684 = vmatprep.subr.mxu0 0.0
  %685 = vmatpush1.msra.mxu0 %v192
  %686 = vmatprep.subr.mxu0 0.0
  %687 = vmatpush2.msra.mxu0 0.0
  %688 = vmatprep.subr.mxu0 0.0
  %689 = vmatpush2.msra.mxu0 0.0
  %690 = vmatprep.subr.mxu0 0.0
  %691 = vmatpush2.msra.mxu0 0.0
  %692 = vmatprep.subr.mxu0 0.0
  %693 = vmatpush2.msra.mxu0 0.0
  %694 = vmatprep.subr.mxu0 0.0
  %695 = vmatpush2.msra.mxu0 0.0
  %696 = vmatprep.subr.mxu0 0.0
  %697 = vmatpush2.msra.mxu0 0.0
  %698 = vmatprep.subr.mxu0 0.0
  %699 = vmatpush2.msra.mxu0 0.0
  %700 = vmatprep.subr.mxu0 0.0
  %701 = vmatpush2.msra.mxu0 0.0
  %702 = vmatprep.subr.mxu0 0.0
  %703 = vmatpush2.msra.mxu0 0.0
  %704 = vmatprep.subr.mxu0 0.0
  %705 = vmatpush2.msra.mxu0 0.0
  %706 = vmatprep.subr.mxu0 0.0
  %707 = vmatpush2.msra.mxu0 0.0
  %708 = vmatprep.subr.mxu0 0.0
  %709 = vmatpush2.msra.mxu0 0.0
  %710 = vmatprep.subr.mxu0 0.0
  %711 = vmatpush2.msra.mxu0 0.0
  %712 = vmatprep.subr.mxu0 0.0
  %713 = vmatpush2.msra.mxu0 0.0
  %714 = vmatprep.subr.mxu0 0.0
  %715 = vmatpush2.msra.mxu0 0.0
  %716 = vmatprep.subr.mxu0 0.0
  %717 = vmatpush2.msra.mxu0 0.0
  %718 = vmatprep.mubr.f32.mxu0 0.0
  %719 = vmatmul.mubr.f32.gmra.mxu0 %v582
  %v720 = vpop.f32.mrf.mxu0
  %v721 = vadd.f32 0.0, %v720
  %v722 = vpop.f32.mrf.mxu0
  %723 = vdwg.mxu0
  %v724 = vadd.f32 %v162, %v721
  %v725 = vtanh.pop %v724
  %v727 = vsel %vm55, %v725, 0
  %729 = vmatprep.subr.mxu0 0.0
  %730 = vmatpush1.msra.mxu0 0.0
  %731 = vmatprep.subr.mxu0 0.0
  %732 = vmatpush1.msra.mxu0 0.0
  %733 = vmatprep.subr.mxu0 0.0
  %734 = vmatpush1.msra.mxu0 0.0
  %735 = vmatprep.subr.mxu0 0.0
  %736 = vmatpush1.msra.mxu0 0.0
  %737 = vmatprep.subr.mxu0 0.0
  %738 = vmatpush1.msra.mxu0 0.0
  %739 = vmatprep.subr.mxu0 0.0
  %740 = vmatpush1.msra.mxu0 0.0
  %741 = vmatprep.subr.mxu0 0.0
  %742 = vmatpush1.msra.mxu0 0.0
  %743 = vmatprep.subr.mxu0 0.0
  %744 = vmatpush1.msra.mxu0 0.0
  %745 = vmatprep.subr.mxu0 0.0
  %746 = vmatpush1.msra.mxu0 %v207
  %747 = vmatprep.subr.mxu0 0.0
  %748 = vmatpush1.msra.mxu0 %v206
  %749 = vmatprep.subr.mxu0 0.0
  %750 = vmatpush1.msra.mxu0 %v205
  %751 = vmatprep.subr.mxu0 0.0
  %752 = vmatpush1.msra.mxu0 %v204
  %753 = vmatprep.subr.mxu0 0.0
  %754 = vmatpush1.msra.mxu0 %v203
  %755 = vmatprep.subr.mxu0 0.0
  %756 = vmatpush1.msra.mxu0 %v202
  %757 = vmatprep.subr.mxu0 0.0
  %758 = vmatpush1.msra.mxu0 %v201
  %759 = vmatprep.subr.mxu0 0.0
  %760 = vmatpush1.msra.mxu0 %v200
  %761 = vmatprep.subr.mxu0 0.0
  %762 = vmatpush2.msra.mxu0 0.0
  %763 = vmatprep.subr.mxu0 0.0
  %764 = vmatpush2.msra.mxu0 0.0
  %765 = vmatprep.subr.mxu0 0.0
  %766 = vmatpush2.msra.mxu0 0.0
  %767 = vmatprep.subr.mxu0 0.0
  %768 = vmatpush2.msra.mxu0 0.0
  %769 = vmatprep.subr.mxu0 0.0
  %770 = vmatpush2.msra.mxu0 0.0
  %771 = vmatprep.subr.mxu0 0.0
  %772 = vmatpush2.msra.mxu0 0.0
  %773 = vmatprep.subr.mxu0 0.0
  %774 = vmatpush2.msra.mxu0 0.0
  %775 = vmatprep.subr.mxu0 0.0
  %776 = vmatpush2.msra.mxu0 0.0
  %777 = vmatprep.subr.mxu0 0.0
  %778 = vmatpush2.msra.mxu0 0.0
  %779 = vmatprep.subr.mxu0 0.0
  %780 = vmatpush2.msra.mxu0 0.0
  %781 = vmatprep.subr.mxu0 0.0
  %782 = vmatpush2.msra.mxu0 0.0
  %783 = vmatprep.subr.mxu0 0.0
  %784 = vmatpush2.msra.mxu0 0.0
  %785 = vmatprep.subr.mxu0 0.0
  %786 = vmatpush2.msra.mxu0 0.0
  %787 = vmatprep.subr.mxu0 0.0
  %788 = vmatpush2.msra.mxu0 0.0
  %789 = vmatprep.subr.mxu0 0.0
  %790 = vmatpush2.msra.mxu0 0.0
  %791 = vmatprep.subr.mxu0 0.0
  %792 = vmatpush2.msra.mxu0 0.0
  %793 = vmatprep.mubr.f32.mxu0 0.0
  %794 = vmatmul.mubr.f32.gmra.mxu0 %v727
  %v795 = vpop.f32.mrf.mxu0
  %v796 = vadd.f32 %v190, %v795
  %v797 = vpop.f32.mrf.mxu0
  %798 = vdwg.mxu0
  %799 = vmatprep.subr.mxu0 0.0
  %800 = vmatpush1.msra.mxu0 0.0
  %801 = vmatprep.subr.mxu0 0.0
  %802 = vmatpush1.msra.mxu0 0.0
  %803 = vmatprep.subr.mxu0 0.0
  %804 = vmatpush1.msra.mxu0 0.0
  %805 = vmatprep.subr.mxu0 0.0
  %806 = vmatpush1.msra.mxu0 0.0
  %807 = vmatprep.subr.mxu0 0.0
  %808 = vmatpush1.msra.mxu0 0.0
  %809 = vmatprep.subr.mxu0 0.0
  %810 = vmatpush1.msra.mxu0 0.0
  %811 = vmatprep.subr.mxu0 0.0
  %812 = vmatpush1.msra.mxu0 0.0
  %813 = vmatprep.subr.mxu0 0.0
  %814 = vmatpush1.msra.mxu0 0.0
  %815 = vmatprep.subr.mxu0 0.0
  %816 = vmatpush1.msra.mxu0 %v199
  %817 = vmatprep.subr.mxu0 0.0
  %818 = vmatpush1.msra.mxu0 %v198
  %819 = vmatprep.subr.mxu0 0.0
  %820 = vmatpush1.msra.mxu0 %v197
  %821 = vmatprep.subr.mxu0 0.0
  %822 = vmatpush1.msra.mxu0 %v196
  %823 = vmatprep.subr.mxu0 0.0
  %824 = vmatpush1.msra.mxu0 %v195
  %825 = vmatprep.subr.mxu0 0.0
  %826 = vmatpush1.msra.mxu0 %v194
  %827 = vmatprep.subr.mxu0 0.0
  %828 = vmatpush1.msra.mxu0 %v193
  %829 = vmatprep.subr.mxu0 0.0
  %830 = vmatpush1.msra.mxu0 %v192
  %831 = vmatprep.subr.mxu0 0.0
  %832 = vmatpush2.msra.mxu0 0.0
  %833 = vmatprep.subr.mxu0 0.0
  %834 = vmatpush2.msra.mxu0 0.0
  %835 = vmatprep.subr.mxu0 0.0
  %836 = vmatpush2.msra.mxu0 0.0
  %837 = vmatprep.subr.mxu0 0.0
  %838 = vmatpush2.msra.mxu0 0.0
  %839 = vmatprep.subr.mxu0 0.0
  %840 = vmatpush2.msra.mxu0 0.0
  %841 = vmatprep.subr.mxu0 0.0
  %842 = vmatpush2.msra.mxu0 0.0
  %843 = vmatprep.subr.mxu0 0.0
  %844 = vmatpush2.msra.mxu0 0.0
  %845 = vmatprep.subr.mxu0 0.0
  %846 = vmatpush2.msra.mxu0 0.0
  %847 = vmatprep.subr.mxu0 0.0
  %848 = vmatpush2.msra.mxu0 0.0
  %849 = vmatprep.subr.mxu0 0.0
  %850 = vmatpush2.msra.mxu0 0.0
  %851 = vmatprep.subr.mxu0 0.0
  %852 = vmatpush2.msra.mxu0 0.0
  %853 = vmatprep.subr.mxu0 0.0
  %854 = vmatpush2.msra.mxu0 0.0
  %855 = vmatprep.subr.mxu0 0.0
  %856 = vmatpush2.msra.mxu0 0.0
  %857 = vmatprep.subr.mxu0 0.0
  %858 = vmatpush2.msra.mxu0 0.0
  %859 = vmatprep.subr.mxu0 0.0
  %860 = vmatpush2.msra.mxu0 0.0
  %861 = vmatprep.subr.mxu0 0.0
  %862 = vmatpush2.msra.mxu0 0.0
  %863 = vmatprep.mubr.f32.mxu0 0.0
  %864 = vmatmul.mubr.f32.gmra.mxu0 %v727
  %v865 = vpop.f32.mrf.mxu0
  %v866 = vadd.f32 0.0, %v865
  %v867 = vpop.f32.mrf.mxu0
  %868 = vdwg.mxu0
  %v869 = vadd.f32 %v167, %v866
  %v870 = vtanh.pop %v869
  %v872 = vsel %vm55, %v870, 0
  %874 = vmatprep.subr.mxu0 0.0
  %875 = vmatpush1.msra.mxu0 0.0
  %876 = vmatprep.subr.mxu0 0.0
  %877 = vmatpush1.msra.mxu0 0.0
  %878 = vmatprep.subr.mxu0 0.0
  %879 = vmatpush1.msra.mxu0 0.0
  %880 = vmatprep.subr.mxu0 0.0
  %881 = vmatpush1.msra.mxu0 0.0
  %882 = vmatprep.subr.mxu0 0.0
  %883 = vmatpush1.msra.mxu0 0.0
  %884 = vmatprep.subr.mxu0 0.0
  %885 = vmatpush1.msra.mxu0 0.0
  %886 = vmatprep.subr.mxu0 0.0
  %887 = vmatpush1.msra.mxu0 0.0
  %888 = vmatprep.subr.mxu0 0.0
  %889 = vmatpush1.msra.mxu0 0.0
  %890 = vmatprep.subr.mxu0 0.0
  %891 = vmatpush1.msra.mxu0 %v207
  %892 = vmatprep.subr.mxu0 0.0
  %893 = vmatpush1.msra.mxu0 %v206
  %894 = vmatprep.subr.mxu0 0.0
  %895 = vmatpush1.msra.mxu0 %v205
  %896 = vmatprep.subr.mxu0 0.0
  %897 = vmatpush1.msra.mxu0 %v204
  %898 = vmatprep.subr.mxu0 0.0
  %899 = vmatpush1.msra.mxu0 %v203
  %900 = vmatprep.subr.mxu0 0.0
  %901 = vmatpush1.msra.mxu0 %v202
  %902 = vmatprep.subr.mxu0 0.0
  %903 = vmatpush1.msra.mxu0 %v201
  %904 = vmatprep.subr.mxu0 0.0
  %905 = vmatpush1.msra.mxu0 %v200
  %906 = vmatprep.subr.mxu0 0.0
  %907 = vmatpush2.msra.mxu0 0.0
  %908 = vmatprep.subr.mxu0 0.0
  %909 = vmatpush2.msra.mxu0 0.0
  %910 = vmatprep.subr.mxu0 0.0
  %911 = vmatpush2.msra.mxu0 0.0
  %912 = vmatprep.subr.mxu0 0.0
  %913 = vmatpush2.msra.mxu0 0.0
  %914 = vmatprep.subr.mxu0 0.0
  %915 = vmatpush2.msra.mxu0 0.0
  %916 = vmatprep.subr.mxu0 0.0
  %917 = vmatpush2.msra.mxu0 0.0
  %918 = vmatprep.subr.mxu0 0.0
  %919 = vmatpush2.msra.mxu0 0.0
  %920 = vmatprep.subr.mxu0 0.0
  %921 = vmatpush2.msra.mxu0 0.0
  %922 = vmatprep.subr.mxu0 0.0
  %923 = vmatpush2.msra.mxu0 0.0
  %924 = vmatprep.subr.mxu0 0.0
  %925 = vmatpush2.msra.mxu0 0.0
  %926 = vmatprep.subr.mxu0 0.0
  %927 = vmatpush2.msra.mxu0 0.0
  %928 = vmatprep.subr.mxu0 0.0
  %929 = vmatpush2.msra.mxu0 0.0
  %930 = vmatprep.subr.mxu0 0.0
  %931 = vmatpush2.msra.mxu0 0.0
  %932 = vmatprep.subr.mxu0 0.0
  %933 = vmatpush2.msra.mxu0 0.0
  %934 = vmatprep.subr.mxu0 0.0
  %935 = vmatpush2.msra.mxu0 0.0
  %936 = vmatprep.subr.mxu0 0.0
  %937 = vmatpush2.msra.mxu0 0.0
  %938 = vmatprep.mubr.f32.mxu0 0.0
  %939 = vmatmul.mubr.f32.gmra.mxu0 %v872
  %v940 = vpop.f32.mrf.mxu0
  %v941 = vadd.f32 %v190, %v940
  %v942 = vpop.f32.mrf.mxu0
  %943 = vdwg.mxu0
  %944 = vmatprep.subr.mxu0 0.0
  %945 = vmatpush1.msra.mxu0 0.0
  %946 = vmatprep.subr.mxu0 0.0
  %947 = vmatpush1.msra.mxu0 0.0
  %948 = vmatprep.subr.mxu0 0.0
  %949 = vmatpush1.msra.mxu0 0.0
  %950 = vmatprep.subr.mxu0 0.0
  %951 = vmatpush1.msra.mxu0 0.0
  %952 = vmatprep.subr.mxu0 0.0
  %953 = vmatpush1.msra.mxu0 0.0
  %954 = vmatprep.subr.mxu0 0.0
  %955 = vmatpush1.msra.mxu0 0.0
  %956 = vmatprep.subr.mxu0 0.0
  %957 = vmatpush1.msra.mxu0 0.0
  %958 = vmatprep.subr.mxu0 0.0
  %959 = vmatpush1.msra.mxu0 0.0
  %960 = vmatprep.subr.mxu0 0.0
  %961 = vmatpush1.msra.mxu0 %v199
  %962 = vmatprep.subr.mxu0 0.0
  %963 = vmatpush1.msra.mxu0 %v198
  %964 = vmatprep.subr.mxu0 0.0
  %965 = vmatpush1.msra.mxu0 %v197
  %966 = vmatprep.subr.mxu0 0.0
  %967 = vmatpush1.msra.mxu0 %v196
  %968 = vmatprep.subr.mxu0 0.0
  %969 = vmatpush1.msra.mxu0 %v195
  %970 = vmatprep.subr.mxu0 0.0
  %971 = vmatpush1.msra.mxu0 %v194
  %972 = vmatprep.subr.mxu0 0.0
  %973 = vmatpush1.msra.mxu0 %v193
  %974 = vmatprep.subr.mxu0 0.0
  %975 = vmatpush1.msra.mxu0 %v192
  %976 = vmatprep.subr.mxu0 0.0
  %977 = vmatpush2.msra.mxu0 0.0
  %978 = vmatprep.subr.mxu0 0.0
  %979 = vmatpush2.msra.mxu0 0.0
  %980 = vmatprep.subr.mxu0 0.0
  %981 = vmatpush2.msra.mxu0 0.0
  %982 = vmatprep.subr.mxu0 0.0
  %983 = vmatpush2.msra.mxu0 0.0
  %984 = vmatprep.subr.mxu0 0.0
  %985 = vmatpush2.msra.mxu0 0.0
  %986 = vmatprep.subr.mxu0 0.0
  %987 = vmatpush2.msra.mxu0 0.0
  %988 = vmatprep.subr.mxu0 0.0
  %989 = vmatpush2.msra.mxu0 0.0
  %990 = vmatprep.subr.mxu0 0.0
  %991 = vmatpush2.msra.mxu0 0.0
  %992 = vmatprep.subr.mxu0 0.0
  %993 = vmatpush2.msra.mxu0 0.0
  %994 = vmatprep.subr.mxu0 0.0
  %995 = vmatpush2.msra.mxu0 0.0
  %996 = vmatprep.subr.mxu0 0.0
  %997 = vmatpush2.msra.mxu0 0.0
  %998 = vmatprep.subr.mxu0 0.0
  %999 = vmatpush2.msra.mxu0 0.0
  %1000 = vmatprep.subr.mxu0 0.0
  %1001 = vmatpush2.msra.mxu0 0.0
  %1002 = vmatprep.subr.mxu0 0.0
  %1003 = vmatpush2.msra.mxu0 0.0
  %1004 = vmatprep.subr.mxu0 0.0
  %1005 = vmatpush2.msra.mxu0 0.0
  %1006 = vmatprep.subr.mxu0 0.0
  %1007 = vmatpush2.msra.mxu0 0.0
  %1008 = vmatprep.mubr.f32.mxu0 0.0
  %1009 = vmatmul.mubr.f32.gmra.mxu0 %v872
  %v1010 = vpop.f32.mrf.mxu0
  %v1011 = vadd.f32 0.0, %v1010
  %v1012 = vpop.f32.mrf.mxu0
  %1013 = vdwg.mxu0
  %v1014 = vadd.f32 %v172, %v1011
  %v1015 = vtanh.pop %v1014
  %v1017 = vsel %vm55, %v1015, 0
  %1019 = vmatprep.subr.mxu0 0.0
  %1020 = vmatpush1.msra.mxu0 0.0
  %1021 = vmatprep.subr.mxu0 0.0
  %1022 = vmatpush1.msra.mxu0 0.0
  %1023 = vmatprep.subr.mxu0 0.0
  %1024 = vmatpush1.msra.mxu0 0.0
  %1025 = vmatprep.subr.mxu0 0.0
  %1026 = vmatpush1.msra.mxu0 0.0
  %1027 = vmatprep.subr.mxu0 0.0
  %1028 = vmatpush1.msra.mxu0 0.0
  %1029 = vmatprep.subr.mxu0 0.0
  %1030 = vmatpush1.msra.mxu0 0.0
  %1031 = vmatprep.subr.mxu0 0.0
  %1032 = vmatpush1.msra.mxu0 0.0
  %1033 = vmatprep.subr.mxu0 0.0
  %1034 = vmatpush1.msra.mxu0 0.0
  %1035 = vmatprep.subr.mxu0 0.0
  %1036 = vmatpush1.msra.mxu0 %v207
  %1037 = vmatprep.subr.mxu0 0.0
  %1038 = vmatpush1.msra.mxu0 %v206
  %1039 = vmatprep.subr.mxu0 0.0
  %1040 = vmatpush1.msra.mxu0 %v205
  %1041 = vmatprep.subr.mxu0 0.0
  %1042 = vmatpush1.msra.mxu0 %v204
  %1043 = vmatprep.subr.mxu0 0.0
  %1044 = vmatpush1.msra.mxu0 %v203
  %1045 = vmatprep.subr.mxu0 0.0
  %1046 = vmatpush1.msra.mxu0 %v202
  %1047 = vmatprep.subr.mxu0 0.0
  %1048 = vmatpush1.msra.mxu0 %v201
  %1049 = vmatprep.subr.mxu0 0.0
  %1050 = vmatpush1.msra.mxu0 %v200
  %1051 = vmatprep.subr.mxu0 0.0
  %1052 = vmatpush2.msra.mxu0 0.0
  %1053 = vmatprep.subr.mxu0 0.0
  %1054 = vmatpush2.msra.mxu0 0.0
  %1055 = vmatprep.subr.mxu0 0.0
  %1056 = vmatpush2.msra.mxu0 0.0
  %1057 = vmatprep.subr.mxu0 0.0
  %1058 = vmatpush2.msra.mxu0 0.0
  %1059 = vmatprep.subr.mxu0 0.0
  %1060 = vmatpush2.msra.mxu0 0.0
  %1061 = vmatprep.subr.mxu0 0.0
  %1062 = vmatpush2.msra.mxu0 0.0
  %1063 = vmatprep.subr.mxu0 0.0
  %1064 = vmatpush2.msra.mxu0 0.0
  %1065 = vmatprep.subr.mxu0 0.0
  %1066 = vmatpush2.msra.mxu0 0.0
  %1067 = vmatprep.subr.mxu0 0.0
  %1068 = vmatpush2.msra.mxu0 0.0
  %1069 = vmatprep.subr.mxu0 0.0
  %1070 = vmatpush2.msra.mxu0 0.0
  %1071 = vmatprep.subr.mxu0 0.0
  %1072 = vmatpush2.msra.mxu0 0.0
  %1073 = vmatprep.subr.mxu0 0.0
  %1074 = vmatpush2.msra.mxu0 0.0
  %1075 = vmatprep.subr.mxu0 0.0
  %1076 = vmatpush2.msra.mxu0 0.0
  %1077 = vmatprep.subr.mxu0 0.0
  %1078 = vmatpush2.msra.mxu0 0.0
  %1079 = vmatprep.subr.mxu0 0.0
  %1080 = vmatpush2.msra.mxu0 0.0
  %1081 = vmatprep.subr.mxu0 0.0
  %1082 = vmatpush2.msra.mxu0 0.0
  %1083 = vmatprep.mubr.f32.mxu0 0.0
  %1084 = vmatmul.mubr.f32.gmra.mxu0 %v1017
  %v1085 = vpop.f32.mrf.mxu0
  %v1086 = vadd.f32 %v190, %v1085
  %v1087 = vpop.f32.mrf.mxu0
  %1088 = vdwg.mxu0
  %1089 = vmatprep.subr.mxu0 0.0
  %1090 = vmatpush1.msra.mxu0 0.0
  %1091 = vmatprep.subr.mxu0 0.0
  %1092 = vmatpush1.msra.mxu0 0.0
  %1093 = vmatprep.subr.mxu0 0.0
  %1094 = vmatpush1.msra.mxu0 0.0
  %1095 = vmatprep.subr.mxu0 0.0
  %1096 = vmatpush1.msra.mxu0 0.0
  %1097 = vmatprep.subr.mxu0 0.0
  %1098 = vmatpush1.msra.mxu0 0.0
  %1099 = vmatprep.subr.mxu0 0.0
  %1100 = vmatpush1.msra.mxu0 0.0
  %1101 = vmatprep.subr.mxu0 0.0
  %1102 = vmatpush1.msra.mxu0 0.0
  %1103 = vmatprep.subr.mxu0 0.0
  %1104 = vmatpush1.msra.mxu0 0.0
  %1105 = vmatprep.subr.mxu0 0.0
  %1106 = vmatpush1.msra.mxu0 %v199
  %1107 = vmatprep.subr.mxu0 0.0
  %1108 = vmatpush1.msra.mxu0 %v198
  %1109 = vmatprep.subr.mxu0 0.0
  %1110 = vmatpush1.msra.mxu0 %v197
  %1111 = vmatprep.subr.mxu0 0.0
  %1112 = vmatpush1.msra.mxu0 %v196
  %1113 = vmatprep.subr.mxu0 0.0
  %1114 = vmatpush1.msra.mxu0 %v195
  %1115 = vmatprep.subr.mxu0 0.0
  %1116 = vmatpush1.msra.mxu0 %v194
  %1117 = vmatprep.subr.mxu0 0.0
  %1118 = vmatpush1.msra.mxu0 %v193
  %1119 = vmatprep.subr.mxu0 0.0
  %1120 = vmatpush1.msra.mxu0 %v192
  %1121 = vmatprep.subr.mxu0 0.0
  %1122 = vmatpush2.msra.mxu0 0.0
  %1123 = vmatprep.subr.mxu0 0.0
  %1124 = vmatpush2.msra.mxu0 0.0
  %1125 = vmatprep.subr.mxu0 0.0
  %1126 = vmatpush2.msra.mxu0 0.0
  %1127 = vmatprep.subr.mxu0 0.0
  %1128 = vmatpush2.msra.mxu0 0.0
  %1129 = vmatprep.subr.mxu0 0.0
  %1130 = vmatpush2.msra.mxu0 0.0
  %1131 = vmatprep.subr.mxu0 0.0
  %1132 = vmatpush2.msra.mxu0 0.0
  %1133 = vmatprep.subr.mxu0 0.0
  %1134 = vmatpush2.msra.mxu0 0.0
  %1135 = vmatprep.subr.mxu0 0.0
  %1136 = vmatpush2.msra.mxu0 0.0
  %1137 = vmatprep.subr.mxu0 0.0
  %1138 = vmatpush2.msra.mxu0 0.0
  %1139 = vmatprep.subr.mxu0 0.0
  %1140 = vmatpush2.msra.mxu0 0.0
  %1141 = vmatprep.subr.mxu0 0.0
  %1142 = vmatpush2.msra.mxu0 0.0
  %1143 = vmatprep.subr.mxu0 0.0
  %1144 = vmatpush2.msra.mxu0 0.0
  %1145 = vmatprep.subr.mxu0 0.0
  %1146 = vmatpush2.msra.mxu0 0.0
  %1147 = vmatprep.subr.mxu0 0.0
  %1148 = vmatpush2.msra.mxu0 0.0
  %1149 = vmatprep.subr.mxu0 0.0
  %1150 = vmatpush2.msra.mxu0 0.0
  %1151 = vmatprep.subr.mxu0 0.0
  %1152 = vmatpush2.msra.mxu0 0.0
  %1153 = vmatprep.mubr.f32.mxu0 0.0
  %1154 = vmatmul.mubr.f32.gmra.mxu0 %v1017
  %v1155 = vpop.f32.mrf.mxu0
  %v1156 = vadd.f32 0.0, %v1155
  %v1157 = vpop.f32.mrf.mxu0
  %1158 = vdwg.mxu0
  %v1159 = vadd.f32 %v177, %v1156
  %v1160 = vtanh.pop %v1159
  %v1162 = vsel %vm55, %v1160, 0
  %1164 = vmatprep.subr.mxu0 0.0
  %1165 = vmatpush1.msra.mxu0 0.0
  %1166 = vmatprep.subr.mxu0 0.0
  %1167 = vmatpush1.msra.mxu0 0.0
  %1168 = vmatprep.subr.mxu0 0.0
  %1169 = vmatpush1.msra.mxu0 0.0
  %1170 = vmatprep.subr.mxu0 0.0
  %1171 = vmatpush1.msra.mxu0 0.0
  %1172 = vmatprep.subr.mxu0 0.0
  %1173 = vmatpush1.msra.mxu0 0.0
  %1174 = vmatprep.subr.mxu0 0.0
  %1175 = vmatpush1.msra.mxu0 0.0
  %1176 = vmatprep.subr.mxu0 0.0
  %1177 = vmatpush1.msra.mxu0 0.0
  %1178 = vmatprep.subr.mxu0 0.0
  %1179 = vmatpush1.msra.mxu0 0.0
  %1180 = vmatprep.subr.mxu0 0.0
  %1181 = vmatpush1.msra.mxu0 %v207
  %1182 = vmatprep.subr.mxu0 0.0
  %1183 = vmatpush1.msra.mxu0 %v206
  %1184 = vmatprep.subr.mxu0 0.0
  %1185 = vmatpush1.msra.mxu0 %v205
  %1186 = vmatprep.subr.mxu0 0.0
  %1187 = vmatpush1.msra.mxu0 %v204
  %1188 = vmatprep.subr.mxu0 0.0
  %1189 = vmatpush1.msra.mxu0 %v203
  %1190 = vmatprep.subr.mxu0 0.0
  %1191 = vmatpush1.msra.mxu0 %v202
  %1192 = vmatprep.subr.mxu0 0.0
  %1193 = vmatpush1.msra.mxu0 %v201
  %1194 = vmatprep.subr.mxu0 0.0
  %1195 = vmatpush1.msra.mxu0 %v200
  %1196 = vmatprep.subr.mxu0 0.0
  %1197 = vmatpush2.msra.mxu0 0.0
  %1198 = vmatprep.subr.mxu0 0.0
  %1199 = vmatpush2.msra.mxu0 0.0
  %1200 = vmatprep.subr.mxu0 0.0
  %1201 = vmatpush2.msra.mxu0 0.0
  %1202 = vmatprep.subr.mxu0 0.0
  %1203 = vmatpush2.msra.mxu0 0.0
  %1204 = vmatprep.subr.mxu0 0.0
  %1205 = vmatpush2.msra.mxu0 0.0
  %1206 = vmatprep.subr.mxu0 0.0
  %1207 = vmatpush2.msra.mxu0 0.0
  %1208 = vmatprep.subr.mxu0 0.0
  %1209 = vmatpush2.msra.mxu0 0.0
  %1210 = vmatprep.subr.mxu0 0.0
  %1211 = vmatpush2.msra.mxu0 0.0
  %1212 = vmatprep.subr.mxu0 0.0
  %1213 = vmatpush2.msra.mxu0 0.0
  %1214 = vmatprep.subr.mxu0 0.0
  %1215 = vmatpush2.msra.mxu0 0.0
  %1216 = vmatprep.subr.mxu0 0.0
  %1217 = vmatpush2.msra.mxu0 0.0
  %1218 = vmatprep.subr.mxu0 0.0
  %1219 = vmatpush2.msra.mxu0 0.0
  %1220 = vmatprep.subr.mxu0 0.0
  %1221 = vmatpush2.msra.mxu0 0.0
  %1222 = vmatprep.subr.mxu0 0.0
  %1223 = vmatpush2.msra.mxu0 0.0
  %1224 = vmatprep.subr.mxu0 0.0
  %1225 = vmatpush2.msra.mxu0 0.0
  %1226 = vmatprep.subr.mxu0 0.0
  %1227 = vmatpush2.msra.mxu0 0.0
  %1228 = vmatprep.mubr.f32.mxu0 0.0
  %1229 = vmatmul.mubr.f32.gmra.mxu0 %v1162
  %v1230 = vpop.f32.mrf.mxu0
  %v1231 = vadd.f32 %v190, %v1230
  %v1232 = vpop.f32.mrf.mxu0
  %1233 = vdwg.mxu0
  %1234 = vmatprep.subr.mxu0 0.0
  %1235 = vmatpush1.msra.mxu0 0.0
  %1236 = vmatprep.subr.mxu0 0.0
  %1237 = vmatpush1.msra.mxu0 0.0
  %1238 = vmatprep.subr.mxu0 0.0
  %1239 = vmatpush1.msra.mxu0 0.0
  %1240 = vmatprep.subr.mxu0 0.0
  %1241 = vmatpush1.msra.mxu0 0.0
  %1242 = vmatprep.subr.mxu0 0.0
  %1243 = vmatpush1.msra.mxu0 0.0
  %1244 = vmatprep.subr.mxu0 0.0
  %1245 = vmatpush1.msra.mxu0 0.0
  %1246 = vmatprep.subr.mxu0 0.0
  %1247 = vmatpush1.msra.mxu0 0.0
  %1248 = vmatprep.subr.mxu0 0.0
  %1249 = vmatpush1.msra.mxu0 0.0
  %1250 = vmatprep.subr.mxu0 0.0
  %1251 = vmatpush1.msra.mxu0 %v199
  %1252 = vmatprep.subr.mxu0 0.0
  %1253 = vmatpush1.msra.mxu0 %v198
  %1254 = vmatprep.subr.mxu0 0.0
  %1255 = vmatpush1.msra.mxu0 %v197
  %1256 = vmatprep.subr.mxu0 0.0
  %1257 = vmatpush1.msra.mxu0 %v196
  %1258 = vmatprep.subr.mxu0 0.0
  %1259 = vmatpush1.msra.mxu0 %v195
  %1260 = vmatprep.subr.mxu0 0.0
  %1261 = vmatpush1.msra.mxu0 %v194
  %1262 = vmatprep.subr.mxu0 0.0
  %1263 = vmatpush1.msra.mxu0 %v193
  %1264 = vmatprep.subr.mxu0 0.0
  %1265 = vmatpush1.msra.mxu0 %v192
  %1266 = vmatprep.subr.mxu0 0.0
  %1267 = vmatpush2.msra.mxu0 0.0
  %1268 = vmatprep.subr.mxu0 0.0
  %1269 = vmatpush2.msra.mxu0 0.0
  %1270 = vmatprep.subr.mxu0 0.0
  %1271 = vmatpush2.msra.mxu0 0.0
  %1272 = vmatprep.subr.mxu0 0.0
  %1273 = vmatpush2.msra.mxu0 0.0
  %1274 = vmatprep.subr.mxu0 0.0
  %1275 = vmatpush2.msra.mxu0 0.0
  %1276 = vmatprep.subr.mxu0 0.0
  %1277 = vmatpush2.msra.mxu0 0.0
  %1278 = vmatprep.subr.mxu0 0.0
  %1279 = vmatpush2.msra.mxu0 0.0
  %1280 = vmatprep.subr.mxu0 0.0
  %1281 = vmatpush2.msra.mxu0 0.0
  %1282 = vmatprep.subr.mxu0 0.0
  %1283 = vmatpush2.msra.mxu0 0.0
  %1284 = vmatprep.subr.mxu0 0.0
  %1285 = vmatpush2.msra.mxu0 0.0
  %1286 = vmatprep.subr.mxu0 0.0
  %1287 = vmatpush2.msra.mxu0 0.0
  %1288 = vmatprep.subr.mxu0 0.0
  %1289 = vmatpush2.msra.mxu0 0.0
  %1290 = vmatprep.subr.mxu0 0.0
  %1291 = vmatpush2.msra.mxu0 0.0
  %1292 = vmatprep.subr.mxu0 0.0
  %1293 = vmatpush2.msra.mxu0 0.0
  %1294 = vmatprep.subr.mxu0 0.0
  %1295 = vmatpush2.msra.mxu0 0.0
  %1296 = vmatprep.subr.mxu0 0.0
  %1297 = vmatpush2.msra.mxu0 0.0
  %1298 = vmatprep.mubr.f32.mxu0 0.0
  %1299 = vmatmul.mubr.f32.gmra.mxu0 %v1162
  %v1300 = vpop.f32.mrf.mxu0
  %v1301 = vadd.f32 0.0, %v1300
  %v1302 = vpop.f32.mrf.mxu0
  %1303 = vdwg.mxu0
  %v1304 = vadd.f32 %v182, %v1301
  %v1305 = vtanh.pop %v1304
  %v1307 = vsel %vm55, %v1305, 0
  %1309 = vmatprep.subr.mxu0 0.0
  %1310 = vmatpush1.msra.mxu0 0.0
  %1311 = vmatprep.subr.mxu0 0.0
  %1312 = vmatpush1.msra.mxu0 0.0
  %1313 = vmatprep.subr.mxu0 0.0
  %1314 = vmatpush1.msra.mxu0 0.0
  %1315 = vmatprep.subr.mxu0 0.0
  %1316 = vmatpush1.msra.mxu0 0.0
  %1317 = vmatprep.subr.mxu0 0.0
  %1318 = vmatpush1.msra.mxu0 0.0
  %1319 = vmatprep.subr.mxu0 0.0
  %1320 = vmatpush1.msra.mxu0 0.0
  %1321 = vmatprep.subr.mxu0 0.0
  %1322 = vmatpush1.msra.mxu0 0.0
  %1323 = vmatprep.subr.mxu0 0.0
  %1324 = vmatpush1.msra.mxu0 0.0
  %1325 = vmatprep.subr.mxu0 0.0
  %1326 = vmatpush1.msra.mxu0 %v207
  %1327 = vmatprep.subr.mxu0 0.0
  %1328 = vmatpush1.msra.mxu0 %v206
  %1329 = vmatprep.subr.mxu0 0.0
  %1330 = vmatpush1.msra.mxu0 %v205
  %1331 = vmatprep.subr.mxu0 0.0
  %1332 = vmatpush1.msra.mxu0 %v204
  %1333 = vmatprep.subr.mxu0 0.0
  %1334 = vmatpush1.msra.mxu0 %v203
  %1335 = vmatprep.subr.mxu0 0.0
  %1336 = vmatpush1.msra.mxu0 %v202
  %1337 = vmatprep.subr.mxu0 0.0
  %1338 = vmatpush1.msra.mxu0 %v201
  %1339 = vmatprep.subr.mxu0 0.0
  %1340 = vmatpush1.msra.mxu0 %v200
  %1341 = vmatprep.subr.mxu0 0.0
  %1342 = vmatpush2.msra.mxu0 0.0
  %1343 = vmatprep.subr.mxu0 0.0
  %1344 = vmatpush2.msra.mxu0 0.0
  %1345 = vmatprep.subr.mxu0 0.0
  %1346 = vmatpush2.msra.mxu0 0.0
  %1347 = vmatprep.subr.mxu0 0.0
  %1348 = vmatpush2.msra.mxu0 0.0
  %1349 = vmatprep.subr.mxu0 0.0
  %1350 = vmatpush2.msra.mxu0 0.0
  %1351 = vmatprep.subr.mxu0 0.0
  %1352 = vmatpush2.msra.mxu0 0.0
  %1353 = vmatprep.subr.mxu0 0.0
  %1354 = vmatpush2.msra.mxu0 0.0
  %1355 = vmatprep.subr.mxu0 0.0
  %1356 = vmatpush2.msra.mxu0 0.0
  %1357 = vmatprep.subr.mxu0 0.0
  %1358 = vmatpush2.msra.mxu0 0.0
  %1359 = vmatprep.subr.mxu0 0.0
  %1360 = vmatpush2.msra.mxu0 0.0
  %1361 = vmatprep.subr.mxu0 0.0
  %1362 = vmatpush2.msra.mxu0 0.0
  %1363 = vmatprep.subr.mxu0 0.0
  %1364 = vmatpush2.msra.mxu0 0.0
  %1365 = vmatprep.subr.mxu0 0.0
  %1366 = vmatpush2.msra.mxu0 0.0
  %1367 = vmatprep.subr.mxu0 0.0
  %1368 = vmatpush2.msra.mxu0 0.0
  %1369 = vmatprep.subr.mxu0 0.0
  %1370 = vmatpush2.msra.mxu0 0.0
  %1371 = vmatprep.subr.mxu0 0.0
  %1372 = vmatpush2.msra.mxu0 0.0
  %1373 = vmatprep.mubr.f32.mxu0 0.0
  %1374 = vmatmul.mubr.f32.gmra.mxu0 %v1307
  %v1375 = vpop.f32.mrf.mxu0
  %v1376 = vadd.f32 %v190, %v1375
  %v1377 = vpop.f32.mrf.mxu0
  %1378 = vdwg.mxu0
  %1379 = vmatprep.subr.mxu0 0.0
  %1380 = vmatpush1.msra.mxu0 0.0
  %1381 = vmatprep.subr.mxu0 0.0
  %1382 = vmatpush1.msra.mxu0 0.0
  %1383 = vmatprep.subr.mxu0 0.0
  %1384 = vmatpush1.msra.mxu0 0.0
  %1385 = vmatprep.subr.mxu0 0.0
  %1386 = vmatpush1.msra.mxu0 0.0
  %1387 = vmatprep.subr.mxu0 0.0
  %1388 = vmatpush1.msra.mxu0 0.0
  %1389 = vmatprep.subr.mxu0 0.0
  %1390 = vmatpush1.msra.mxu0 0.0
  %1391 = vmatprep.subr.mxu0 0.0
  %1392 = vmatpush1.msra.mxu0 0.0
  %1393 = vmatprep.subr.mxu0 0.0
  %1394 = vmatpush1.msra.mxu0 0.0
  %1395 = vmatprep.subr.mxu0 0.0
  %1396 = vmatpush1.msra.mxu0 %v215
  %1397 = vmatprep.subr.mxu0 0.0
  %1398 = vmatpush1.msra.mxu0 %v214
  %1399 = vmatprep.subr.mxu0 0.0
  %1400 = vmatpush1.msra.mxu0 %v213
  %1401 = vmatprep.subr.mxu0 0.0
  %1402 = vmatpush1.msra.mxu0 %v212
  %1403 = vmatprep.subr.mxu0 0.0
  %1404 = vmatpush1.msra.mxu0 %v211
  %1405 = vmatprep.subr.mxu0 0.0
  %1406 = vmatpush1.msra.mxu0 %v210
  %1407 = vmatprep.subr.mxu0 0.0
  %1408 = vmatpush1.msra.mxu0 %v209
  %1409 = vmatprep.subr.mxu0 0.0
  %1410 = vmatpush1.msra.mxu0 %v208
  %1411 = vmatprep.subr.mxu0 0.0
  %1412 = vmatpush2.msra.mxu0 0.0
  %1413 = vmatprep.subr.mxu0 0.0
  %1414 = vmatpush2.msra.mxu0 0.0
  %1415 = vmatprep.subr.mxu0 0.0
  %1416 = vmatpush2.msra.mxu0 0.0
  %1417 = vmatprep.subr.mxu0 0.0
  %1418 = vmatpush2.msra.mxu0 0.0
  %1419 = vmatprep.subr.mxu0 0.0
  %1420 = vmatpush2.msra.mxu0 0.0
  %1421 = vmatprep.subr.mxu0 0.0
  %1422 = vmatpush2.msra.mxu0 0.0
  %1423 = vmatprep.subr.mxu0 0.0
  %1424 = vmatpush2.msra.mxu0 0.0
  %1425 = vmatprep.subr.mxu0 0.0
  %1426 = vmatpush2.msra.mxu0 0.0
  %1427 = vmatprep.subr.mxu0 0.0
  %1428 = vmatpush2.msra.mxu0 0.0
  %1429 = vmatprep.subr.mxu0 0.0
  %1430 = vmatpush2.msra.mxu0 0.0
  %1431 = vmatprep.subr.mxu0 0.0
  %1432 = vmatpush2.msra.mxu0 0.0
  %1433 = vmatprep.subr.mxu0 0.0
  %1434 = vmatpush2.msra.mxu0 0.0
  %1435 = vmatprep.subr.mxu0 0.0
  %1436 = vmatpush2.msra.mxu0 0.0
  %1437 = vmatprep.subr.mxu0 0.0
  %1438 = vmatpush2.msra.mxu0 0.0
  %1439 = vmatprep.subr.mxu0 0.0
  %1440 = vmatpush2.msra.mxu0 0.0
  %1441 = vmatprep.subr.mxu0 0.0
  %1442 = vmatpush2.msra.mxu0 0.0
  %1443 = vmatprep.mubr.f32.mxu0 0.0
  %1444 = vmatmul.mubr.f32.gmra.mxu0 %v217
  %v1445 = vpop.f32.mrf.mxu0
  %v1446 = vadd.f32 0.0, %v1445
  %v1447 = vpop.f32.mrf.mxu0
  %1448 = vdwg.mxu0
  %v1449 = vadd.f32 %v361, %v1446
  %v1450 = vtanh.pop %v1449
  %v1452 = vsel %vm55, %v1450, 0
  %1454 = vmatprep.subr.mxu0 0.0
  %1455 = vmatpush1.msra.mxu0 0.0
  %1456 = vmatprep.subr.mxu0 0.0
  %1457 = vmatpush1.msra.mxu0 0.0
  %1458 = vmatprep.subr.mxu0 0.0
  %1459 = vmatpush1.msra.mxu0 0.0
  %1460 = vmatprep.subr.mxu0 0.0
  %1461 = vmatpush1.msra.mxu0 0.0
  %1462 = vmatprep.subr.mxu0 0.0
  %1463 = vmatpush1.msra.mxu0 0.0
  %1464 = vmatprep.subr.mxu0 0.0
  %1465 = vmatpush1.msra.mxu0 0.0
  %1466 = vmatprep.subr.mxu0 0.0
  %1467 = vmatpush1.msra.mxu0 0.0
  %1468 = vmatprep.subr.mxu0 0.0
  %1469 = vmatpush1.msra.mxu0 0.0
  %1470 = vmatprep.subr.mxu0 0.0
  %1471 = vmatpush1.msra.mxu0 %v215
  %1472 = vmatprep.subr.mxu0 0.0
  %1473 = vmatpush1.msra.mxu0 %v214
  %1474 = vmatprep.subr.mxu0 0.0
  %1475 = vmatpush1.msra.mxu0 %v213
  %1476 = vmatprep.subr.mxu0 0.0
  %1477 = vmatpush1.msra.mxu0 %v212
  %1478 = vmatprep.subr.mxu0 0.0
  %1479 = vmatpush1.msra.mxu0 %v211
  %1480 = vmatprep.subr.mxu0 0.0
  %1481 = vmatpush1.msra.mxu0 %v210
  %1482 = vmatprep.subr.mxu0 0.0
  %1483 = vmatpush1.msra.mxu0 %v209
  %1484 = vmatprep.subr.mxu0 0.0
  %1485 = vmatpush1.msra.mxu0 %v208
  %1486 = vmatprep.subr.mxu0 0.0
  %1487 = vmatpush2.msra.mxu0 0.0
  %1488 = vmatprep.subr.mxu0 0.0
  %1489 = vmatpush2.msra.mxu0 0.0
  %1490 = vmatprep.subr.mxu0 0.0
  %1491 = vmatpush2.msra.mxu0 0.0
  %1492 = vmatprep.subr.mxu0 0.0
  %1493 = vmatpush2.msra.mxu0 0.0
  %1494 = vmatprep.subr.mxu0 0.0
  %1495 = vmatpush2.msra.mxu0 0.0
  %1496 = vmatprep.subr.mxu0 0.0
  %1497 = vmatpush2.msra.mxu0 0.0
  %1498 = vmatprep.subr.mxu0 0.0
  %1499 = vmatpush2.msra.mxu0 0.0
  %1500 = vmatprep.subr.mxu0 0.0
  %1501 = vmatpush2.msra.mxu0 0.0
  %1502 = vmatprep.subr.mxu0 0.0
  %1503 = vmatpush2.msra.mxu0 0.0
  %1504 = vmatprep.subr.mxu0 0.0
  %1505 = vmatpush2.msra.mxu0 0.0
  %1506 = vmatprep.subr.mxu0 0.0
  %1507 = vmatpush2.msra.mxu0 0.0
  %1508 = vmatprep.subr.mxu0 0.0
  %1509 = vmatpush2.msra.mxu0 0.0
  %1510 = vmatprep.subr.mxu0 0.0
  %1511 = vmatpush2.msra.mxu0 0.0
  %1512 = vmatprep.subr.mxu0 0.0
  %1513 = vmatpush2.msra.mxu0 0.0
  %1514 = vmatprep.subr.mxu0 0.0
  %1515 = vmatpush2.msra.mxu0 0.0
  %1516 = vmatprep.subr.mxu0 0.0
  %1517 = vmatpush2.msra.mxu0 0.0
  %1518 = vmatprep.mubr.f32.mxu0 0.0
  %1519 = vmatmul.mubr.f32.gmra.mxu0 %v1452
  %v1520 = vpop.f32.mrf.mxu0
  %v1521 = vadd.f32 0.0, %v1520
  %v1522 = vpop.f32.mrf.mxu0
  %1523 = vdwg.mxu0
  %v1524 = vadd.f32 %v506, %v1521
  %v1525 = vtanh.pop %v1524
  %v1527 = vsel %vm55, %v1525, 0
  %1529 = vmatprep.subr.mxu0 0.0
  %1530 = vmatpush1.msra.mxu0 0.0
  %1531 = vmatprep.subr.mxu0 0.0
  %1532 = vmatpush1.msra.mxu0 0.0
  %1533 = vmatprep.subr.mxu0 0.0
  %1534 = vmatpush1.msra.mxu0 0.0
  %1535 = vmatprep.subr.mxu0 0.0
  %1536 = vmatpush1.msra.mxu0 0.0
  %1537 = vmatprep.subr.mxu0 0.0
  %1538 = vmatpush1.msra.mxu0 0.0
  %1539 = vmatprep.subr.mxu0 0.0
  %1540 = vmatpush1.msra.mxu0 0.0
  %1541 = vmatprep.subr.mxu0 0.0
  %1542 = vmatpush1.msra.mxu0 0.0
  %1543 = vmatprep.subr.mxu0 0.0
  %1544 = vmatpush1.msra.mxu0 0.0
  %1545 = vmatprep.subr.mxu0 0.0
  %1546 = vmatpush1.msra.mxu0 %v215
  %1547 = vmatprep.subr.mxu0 0.0
  %1548 = vmatpush1.msra.mxu0 %v214
  %1549 = vmatprep.subr.mxu0 0.0
  %1550 = vmatpush1.msra.mxu0 %v213
  %1551 = vmatprep.subr.mxu0 0.0
  %1552 = vmatpush1.msra.mxu0 %v212
  %1553 = vmatprep.subr.mxu0 0.0
  %1554 = vmatpush1.msra.mxu0 %v211
  %1555 = vmatprep.subr.mxu0 0.0
  %1556 = vmatpush1.msra.mxu0 %v210
  %1557 = vmatprep.subr.mxu0 0.0
  %1558 = vmatpush1.msra.mxu0 %v209
  %1559 = vmatprep.subr.mxu0 0.0
  %1560 = vmatpush1.msra.mxu0 %v208
  %1561 = vmatprep.subr.mxu0 0.0
  %1562 = vmatpush2.msra.mxu0 0.0
  %1563 = vmatprep.subr.mxu0 0.0
  %1564 = vmatpush2.msra.mxu0 0.0
  %1565 = vmatprep.subr.mxu0 0.0
  %1566 = vmatpush2.msra.mxu0 0.0
  %1567 = vmatprep.subr.mxu0 0.0
  %1568 = vmatpush2.msra.mxu0 0.0
  %1569 = vmatprep.subr.mxu0 0.0
  %1570 = vmatpush2.msra.mxu0 0.0
  %1571 = vmatprep.subr.mxu0 0.0
  %1572 = vmatpush2.msra.mxu0 0.0
  %1573 = vmatprep.subr.mxu0 0.0
  %1574 = vmatpush2.msra.mxu0 0.0
  %1575 = vmatprep.subr.mxu0 0.0
  %1576 = vmatpush2.msra.mxu0 0.0
  %1577 = vmatprep.subr.mxu0 0.0
  %1578 = vmatpush2.msra.mxu0 0.0
  %1579 = vmatprep.subr.mxu0 0.0
  %1580 = vmatpush2.msra.mxu0 0.0
  %1581 = vmatprep.subr.mxu0 0.0
  %1582 = vmatpush2.msra.mxu0 0.0
  %1583 = vmatprep.subr.mxu0 0.0
  %1584 = vmatpush2.msra.mxu0 0.0
  %1585 = vmatprep.subr.mxu0 0.0
  %1586 = vmatpush2.msra.mxu0 0.0
  %1587 = vmatprep.subr.mxu0 0.0
  %1588 = vmatpush2.msra.mxu0 0.0
  %1589 = vmatprep.subr.mxu0 0.0
  %1590 = vmatpush2.msra.mxu0 0.0
  %1591 = vmatprep.subr.mxu0 0.0
  %1592 = vmatpush2.msra.mxu0 0.0
  %1593 = vmatprep.mubr.f32.mxu0 0.0
  %1594 = vmatmul.mubr.f32.gmra.mxu0 %v1527
  %v1595 = vpop.f32.mrf.mxu0
  %v1596 = vadd.f32 0.0, %v1595
  %v1597 = vpop.f32.mrf.mxu0
  %1598 = vdwg.mxu0
  %v1599 = vadd.f32 %v651, %v1596
  %v1600 = vtanh.pop %v1599
  %v1602 = vsel %vm55, %v1600, 0
  %1604 = vmatprep.subr.mxu0 0.0
  %1605 = vmatpush1.msra.mxu0 0.0
  %1606 = vmatprep.subr.mxu0 0.0
  %1607 = vmatpush1.msra.mxu0 0.0
  %1608 = vmatprep.subr.mxu0 0.0
  %1609 = vmatpush1.msra.mxu0 0.0
  %1610 = vmatprep.subr.mxu0 0.0
  %1611 = vmatpush1.msra.mxu0 0.0
  %1612 = vmatprep.subr.mxu0 0.0
  %1613 = vmatpush1.msra.mxu0 0.0
  %1614 = vmatprep.subr.mxu0 0.0
  %1615 = vmatpush1.msra.mxu0 0.0
  %1616 = vmatprep.subr.mxu0 0.0
  %1617 = vmatpush1.msra.mxu0 0.0
  %1618 = vmatprep.subr.mxu0 0.0
  %1619 = vmatpush1.msra.mxu0 0.0
  %1620 = vmatprep.subr.mxu0 0.0
  %1621 = vmatpush1.msra.mxu0 %v215
  %1622 = vmatprep.subr.mxu0 0.0
  %1623 = vmatpush1.msra.mxu0 %v214
  %1624 = vmatprep.subr.mxu0 0.0
  %1625 = vmatpush1.msra.mxu0 %v213
  %1626 = vmatprep.subr.mxu0 0.0
  %1627 = vmatpush1.msra.mxu0 %v212
  %1628 = vmatprep.subr.mxu0 0.0
  %1629 = vmatpush1.msra.mxu0 %v211
  %1630 = vmatprep.subr.mxu0 0.0
  %1631 = vmatpush1.msra.mxu0 %v210
  %1632 = vmatprep.subr.mxu0 0.0
  %1633 = vmatpush1.msra.mxu0 %v209
  %1634 = vmatprep.subr.mxu0 0.0
  %1635 = vmatpush1.msra.mxu0 %v208
  %1636 = vmatprep.subr.mxu0 0.0
  %1637 = vmatpush2.msra.mxu0 0.0
  %1638 = vmatprep.subr.mxu0 0.0
  %1639 = vmatpush2.msra.mxu0 0.0
  %1640 = vmatprep.subr.mxu0 0.0
  %1641 = vmatpush2.msra.mxu0 0.0
  %1642 = vmatprep.subr.mxu0 0.0
  %1643 = vmatpush2.msra.mxu0 0.0
  %1644 = vmatprep.subr.mxu0 0.0
  %1645 = vmatpush2.msra.mxu0 0.0
  %1646 = vmatprep.subr.mxu0 0.0
  %1647 = vmatpush2.msra.mxu0 0.0
  %1648 = vmatprep.subr.mxu0 0.0
  %1649 = vmatpush2.msra.mxu0 0.0
  %1650 = vmatprep.subr.mxu0 0.0
  %1651 = vmatpush2.msra.mxu0 0.0
  %1652 = vmatprep.subr.mxu0 0.0
  %1653 = vmatpush2.msra.mxu0 0.0
  %1654 = vmatprep.subr.mxu0 0.0
  %1655 = vmatpush2.msra.mxu0 0.0
  %1656 = vmatprep.subr.mxu0 0.0
  %1657 = vmatpush2.msra.mxu0 0.0
  %1658 = vmatprep.subr.mxu0 0.0
  %1659 = vmatpush2.msra.mxu0 0.0
  %1660 = vmatprep.subr.mxu0 0.0
  %1661 = vmatpush2.msra.mxu0 0.0
  %1662 = vmatprep.subr.mxu0 0.0
  %1663 = vmatpush2.msra.mxu0 0.0
  %1664 = vmatprep.subr.mxu0 0.0
  %1665 = vmatpush2.msra.mxu0 0.0
  %1666 = vmatprep.subr.mxu0 0.0
  %1667 = vmatpush2.msra.mxu0 0.0
  %1668 = vmatprep.mubr.f32.mxu0 0.0
  %1669 = vmatmul.mubr.f32.gmra.mxu0 %v1602
  %v1670 = vpop.f32.mrf.mxu0
  %v1671 = vadd.f32 0.0, %v1670
  %v1672 = vpop.f32.mrf.mxu0
  %1673 = vdwg.mxu0
  %v1674 = vadd.f32 %v796, %v1671
  %v1675 = vtanh.pop %v1674
  %v1677 = vsel %vm55, %v1675, 0
  %1679 = vmatprep.subr.mxu0 0.0
  %1680 = vmatpush1.msra.mxu0 0.0
  %1681 = vmatprep.subr.mxu0 0.0
  %1682 = vmatpush1.msra.mxu0 0.0
  %1683 = vmatprep.subr.mxu0 0.0
  %1684 = vmatpush1.msra.mxu0 0.0
  %1685 = vmatprep.subr.mxu0 0.0
  %1686 = vmatpush1.msra.mxu0 0.0
  %1687 = vmatprep.subr.mxu0 0.0
  %1688 = vmatpush1.msra.mxu0 0.0
  %1689 = vmatprep.subr.mxu0 0.0
  %1690 = vmatpush1.msra.mxu0 0.0
  %1691 = vmatprep.subr.mxu0 0.0
  %1692 = vmatpush1.msra.mxu0 0.0
  %1693 = vmatprep.subr.mxu0 0.0
  %1694 = vmatpush1.msra.mxu0 0.0
  %1695 = vmatprep.subr.mxu0 0.0
  %1696 = vmatpush1.msra.mxu0 %v215
  %1697 = vmatprep.subr.mxu0 0.0
  %1698 = vmatpush1.msra.mxu0 %v214
  %1699 = vmatprep.subr.mxu0 0.0
  %1700 = vmatpush1.msra.mxu0 %v213
  %1701 = vmatprep.subr.mxu0 0.0
  %1702 = vmatpush1.msra.mxu0 %v212
  %1703 = vmatprep.subr.mxu0 0.0
  %1704 = vmatpush1.msra.mxu0 %v211
  %1705 = vmatprep.subr.mxu0 0.0
  %1706 = vmatpush1.msra.mxu0 %v210
  %1707 = vmatprep.subr.mxu0 0.0
  %1708 = vmatpush1.msra.mxu0 %v209
  %1709 = vmatprep.subr.mxu0 0.0
  %1710 = vmatpush1.msra.mxu0 %v208
  %1711 = vmatprep.subr.mxu0 0.0
  %1712 = vmatpush2.msra.mxu0 0.0
  %1713 = vmatprep.subr.mxu0 0.0
  %1714 = vmatpush2.msra.mxu0 0.0
  %1715 = vmatprep.subr.mxu0 0.0
  %1716 = vmatpush2.msra.mxu0 0.0
  %1717 = vmatprep.subr.mxu0 0.0
  %1718 = vmatpush2.msra.mxu0 0.0
  %1719 = vmatprep.subr.mxu0 0.0
  %1720 = vmatpush2.msra.mxu0 0.0
  %1721 = vmatprep.subr.mxu0 0.0
  %1722 = vmatpush2.msra.mxu0 0.0
  %1723 = vmatprep.subr.mxu0 0.0
  %1724 = vmatpush2.msra.mxu0 0.0
  %1725 = vmatprep.subr.mxu0 0.0
  %1726 = vmatpush2.msra.mxu0 0.0
  %1727 = vmatprep.subr.mxu0 0.0
  %1728 = vmatpush2.msra.mxu0 0.0
  %1729 = vmatprep.subr.mxu0 0.0
  %1730 = vmatpush2.msra.mxu0 0.0
  %1731 = vmatprep.subr.mxu0 0.0
  %1732 = vmatpush2.msra.mxu0 0.0
  %1733 = vmatprep.subr.mxu0 0.0
  %1734 = vmatpush2.msra.mxu0 0.0
  %1735 = vmatprep.subr.mxu0 0.0
  %1736 = vmatpush2.msra.mxu0 0.0
  %1737 = vmatprep.subr.mxu0 0.0
  %1738 = vmatpush2.msra.mxu0 0.0
  %1739 = vmatprep.subr.mxu0 0.0
  %1740 = vmatpush2.msra.mxu0 0.0
  %1741 = vmatprep.subr.mxu0 0.0
  %1742 = vmatpush2.msra.mxu0 0.0
  %1743 = vmatprep.mubr.f32.mxu0 0.0
  %1744 = vmatmul.mubr.f32.gmra.mxu0 %v1677
  %v1745 = vpop.f32.mrf.mxu0
  %v1746 = vadd.f32 0.0, %v1745
  %v1747 = vpop.f32.mrf.mxu0
  %1748 = vdwg.mxu0
  %v1749 = vadd.f32 %v941, %v1746
  %v1750 = vtanh.pop %v1749
  %v1752 = vsel %vm55, %v1750, 0
  %1754 = vmatprep.subr.mxu0 0.0
  %1755 = vmatpush1.msra.mxu0 0.0
  %1756 = vmatprep.subr.mxu0 0.0
  %1757 = vmatpush1.msra.mxu0 0.0
  %1758 = vmatprep.subr.mxu0 0.0
  %1759 = vmatpush1.msra.mxu0 0.0
  %1760 = vmatprep.subr.mxu0 0.0
  %1761 = vmatpush1.msra.mxu0 0.0
  %1762 = vmatprep.subr.mxu0 0.0
  %1763 = vmatpush1.msra.mxu0 0.0
  %1764 = vmatprep.subr.mxu0 0.0
  %1765 = vmatpush1.msra.mxu0 0.0
  %1766 = vmatprep.subr.mxu0 0.0
  %1767 = vmatpush1.msra.mxu0 0.0
  %1768 = vmatprep.subr.mxu0 0.0
  %1769 = vmatpush1.msra.mxu0 0.0
  %1770 = vmatprep.subr.mxu0 0.0
  %1771 = vmatpush1.msra.mxu0 %v215
  %1772 = vmatprep.subr.mxu0 0.0
  %1773 = vmatpush1.msra.mxu0 %v214
  %1774 = vmatprep.subr.mxu0 0.0
  %1775 = vmatpush1.msra.mxu0 %v213
  %1776 = vmatprep.subr.mxu0 0.0
  %1777 = vmatpush1.msra.mxu0 %v212
  %1778 = vmatprep.subr.mxu0 0.0
  %1779 = vmatpush1.msra.mxu0 %v211
  %1780 = vmatprep.subr.mxu0 0.0
  %1781 = vmatpush1.msra.mxu0 %v210
  %1782 = vmatprep.subr.mxu0 0.0
  %1783 = vmatpush1.msra.mxu0 %v209
  %1784 = vmatprep.subr.mxu0 0.0
  %1785 = vmatpush1.msra.mxu0 %v208
  %1786 = vmatprep.subr.mxu0 0.0
  %1787 = vmatpush2.msra.mxu0 0.0
  %1788 = vmatprep.subr.mxu0 0.0
  %1789 = vmatpush2.msra.mxu0 0.0
  %1790 = vmatprep.subr.mxu0 0.0
  %1791 = vmatpush2.msra.mxu0 0.0
  %1792 = vmatprep.subr.mxu0 0.0
  %1793 = vmatpush2.msra.mxu0 0.0
  %1794 = vmatprep.subr.mxu0 0.0
  %1795 = vmatpush2.msra.mxu0 0.0
  %1796 = vmatprep.subr.mxu0 0.0
  %1797 = vmatpush2.msra.mxu0 0.0
  %1798 = vmatprep.subr.mxu0 0.0
  %1799 = vmatpush2.msra.mxu0 0.0
  %1800 = vmatprep.subr.mxu0 0.0
  %1801 = vmatpush2.msra.mxu0 0.0
  %1802 = vmatprep.subr.mxu0 0.0
  %1803 = vmatpush2.msra.mxu0 0.0
  %1804 = vmatprep.subr.mxu0 0.0
  %1805 = vmatpush2.msra.mxu0 0.0
  %1806 = vmatprep.subr.mxu0 0.0
  %1807 = vmatpush2.msra.mxu0 0.0
  %1808 = vmatprep.subr.mxu0 0.0
  %1809 = vmatpush2.msra.mxu0 0.0
  %1810 = vmatprep.subr.mxu0 0.0
  %1811 = vmatpush2.msra.mxu0 0.0
  %1812 = vmatprep.subr.mxu0 0.0
  %1813 = vmatpush2.msra.mxu0 0.0
  %1814 = vmatprep.subr.mxu0 0.0
  %1815 = vmatpush2.msra.mxu0 0.0
  %1816 = vmatprep.subr.mxu0 0.0
  %1817 = vmatpush2.msra.mxu0 0.0
  %1818 = vmatprep.mubr.f32.mxu0 0.0
  %1819 = vmatmul.mubr.f32.gmra.mxu0 %v1752
  %v1820 = vpop.f32.mrf.mxu0
  %v1821 = vadd.f32 0.0, %v1820
  %v1822 = vpop.f32.mrf.mxu0
  %1823 = vdwg.mxu0
  %v1824 = vadd.f32 %v1086, %v1821
  %v1825 = vtanh.pop %v1824
  %v1827 = vsel %vm55, %v1825, 0
  %1829 = vmatprep.subr.mxu0 0.0
  %1830 = vmatpush1.msra.mxu0 0.0
  %1831 = vmatprep.subr.mxu0 0.0
  %1832 = vmatpush1.msra.mxu0 0.0
  %1833 = vmatprep.subr.mxu0 0.0
  %1834 = vmatpush1.msra.mxu0 0.0
  %1835 = vmatprep.subr.mxu0 0.0
  %1836 = vmatpush1.msra.mxu0 0.0
  %1837 = vmatprep.subr.mxu0 0.0
  %1838 = vmatpush1.msra.mxu0 0.0
  %1839 = vmatprep.subr.mxu0 0.0
  %1840 = vmatpush1.msra.mxu0 0.0
  %1841 = vmatprep.subr.mxu0 0.0
  %1842 = vmatpush1.msra.mxu0 0.0
  %1843 = vmatprep.subr.mxu0 0.0
  %1844 = vmatpush1.msra.mxu0 0.0
  %1845 = vmatprep.subr.mxu0 0.0
  %1846 = vmatpush1.msra.mxu0 %v215
  %1847 = vmatprep.subr.mxu0 0.0
  %1848 = vmatpush1.msra.mxu0 %v214
  %1849 = vmatprep.subr.mxu0 0.0
  %1850 = vmatpush1.msra.mxu0 %v213
  %1851 = vmatprep.subr.mxu0 0.0
  %1852 = vmatpush1.msra.mxu0 %v212
  %1853 = vmatprep.subr.mxu0 0.0
  %1854 = vmatpush1.msra.mxu0 %v211
  %1855 = vmatprep.subr.mxu0 0.0
  %1856 = vmatpush1.msra.mxu0 %v210
  %1857 = vmatprep.subr.mxu0 0.0
  %1858 = vmatpush1.msra.mxu0 %v209
  %1859 = vmatprep.subr.mxu0 0.0
  %1860 = vmatpush1.msra.mxu0 %v208
  %1861 = vmatprep.subr.mxu0 0.0
  %1862 = vmatpush2.msra.mxu0 0.0
  %1863 = vmatprep.subr.mxu0 0.0
  %1864 = vmatpush2.msra.mxu0 0.0
  %1865 = vmatprep.subr.mxu0 0.0
  %1866 = vmatpush2.msra.mxu0 0.0
  %1867 = vmatprep.subr.mxu0 0.0
  %1868 = vmatpush2.msra.mxu0 0.0
  %1869 = vmatprep.subr.mxu0 0.0
  %1870 = vmatpush2.msra.mxu0 0.0
  %1871 = vmatprep.subr.mxu0 0.0
  %1872 = vmatpush2.msra.mxu0 0.0
  %1873 = vmatprep.subr.mxu0 0.0
  %1874 = vmatpush2.msra.mxu0 0.0
  %1875 = vmatprep.subr.mxu0 0.0
  %1876 = vmatpush2.msra.mxu0 0.0
  %1877 = vmatprep.subr.mxu0 0.0
  %1878 = vmatpush2.msra.mxu0 0.0
  %1879 = vmatprep.subr.mxu0 0.0
  %1880 = vmatpush2.msra.mxu0 0.0
  %1881 = vmatprep.subr.mxu0 0.0
  %1882 = vmatpush2.msra.mxu0 0.0
  %1883 = vmatprep.subr.mxu0 0.0
  %1884 = vmatpush2.msra.mxu0 0.0
  %1885 = vmatprep.subr.mxu0 0.0
  %1886 = vmatpush2.msra.mxu0 0.0
  %1887 = vmatprep.subr.mxu0 0.0
  %1888 = vmatpush2.msra.mxu0 0.0
  %1889 = vmatprep.subr.mxu0 0.0
  %1890 = vmatpush2.msra.mxu0 0.0
  %1891 = vmatprep.subr.mxu0 0.0
  %1892 = vmatpush2.msra.mxu0 0.0
  %1893 = vmatprep.mubr.f32.mxu0 0.0
  %1894 = vmatmul.mubr.f32.gmra.mxu0 %v1827
  %v1895 = vpop.f32.mrf.mxu0
  %v1896 = vadd.f32 0.0, %v1895
  %v1897 = vpop.f32.mrf.mxu0
  %1898 = vdwg.mxu0
  %v1899 = vadd.f32 %v1231, %v1896
  %v1900 = vtanh.pop %v1899
  %v1902 = vsel %vm55, %v1900, 0
  %1904 = vmatprep.subr.mxu0 0.0
  %1905 = vmatpush1.msra.mxu0 0.0
  %1906 = vmatprep.subr.mxu0 0.0
  %1907 = vmatpush1.msra.mxu0 0.0
  %1908 = vmatprep.subr.mxu0 0.0
  %1909 = vmatpush1.msra.mxu0 0.0
  %1910 = vmatprep.subr.mxu0 0.0
  %1911 = vmatpush1.msra.mxu0 0.0
  %1912 = vmatprep.subr.mxu0 0.0
  %1913 = vmatpush1.msra.mxu0 0.0
  %1914 = vmatprep.subr.mxu0 0.0
  %1915 = vmatpush1.msra.mxu0 0.0
  %1916 = vmatprep.subr.mxu0 0.0
  %1917 = vmatpush1.msra.mxu0 0.0
  %1918 = vmatprep.subr.mxu0 0.0
  %1919 = vmatpush1.msra.mxu0 0.0
  %1920 = vmatprep.subr.mxu0 0.0
  %1921 = vmatpush1.msra.mxu0 %v215
  %1922 = vmatprep.subr.mxu0 0.0
  %1923 = vmatpush1.msra.mxu0 %v214
  %1924 = vmatprep.subr.mxu0 0.0
  %1925 = vmatpush1.msra.mxu0 %v213
  %1926 = vmatprep.subr.mxu0 0.0
  %1927 = vmatpush1.msra.mxu0 %v212
  %1928 = vmatprep.subr.mxu0 0.0
  %1929 = vmatpush1.msra.mxu0 %v211
  %1930 = vmatprep.subr.mxu0 0.0
  %1931 = vmatpush1.msra.mxu0 %v210
  %1932 = vmatprep.subr.mxu0 0.0
  %1933 = vmatpush1.msra.mxu0 %v209
  %1934 = vmatprep.subr.mxu0 0.0
  %1935 = vmatpush1.msra.mxu0 %v208
  %1936 = vmatprep.subr.mxu0 0.0
  %1937 = vmatpush2.msra.mxu0 0.0
  %1938 = vmatprep.subr.mxu0 0.0
  %1939 = vmatpush2.msra.mxu0 0.0
  %1940 = vmatprep.subr.mxu0 0.0
  %1941 = vmatpush2.msra.mxu0 0.0
  %1942 = vmatprep.subr.mxu0 0.0
  %1943 = vmatpush2.msra.mxu0 0.0
  %1944 = vmatprep.subr.mxu0 0.0
  %1945 = vmatpush2.msra.mxu0 0.0
  %1946 = vmatprep.subr.mxu0 0.0
  %1947 = vmatpush2.msra.mxu0 0.0
  %1948 = vmatprep.subr.mxu0 0.0
  %1949 = vmatpush2.msra.mxu0 0.0
  %1950 = vmatprep.subr.mxu0 0.0
  %1951 = vmatpush2.msra.mxu0 0.0
  %1952 = vmatprep.subr.mxu0 0.0
  %1953 = vmatpush2.msra.mxu0 0.0
  %1954 = vmatprep.subr.mxu0 0.0
  %1955 = vmatpush2.msra.mxu0 0.0
  %1956 = vmatprep.subr.mxu0 0.0
  %1957 = vmatpush2.msra.mxu0 0.0
  %1958 = vmatprep.subr.mxu0 0.0
  %1959 = vmatpush2.msra.mxu0 0.0
  %1960 = vmatprep.subr.mxu0 0.0
  %1961 = vmatpush2.msra.mxu0 0.0
  %1962 = vmatprep.subr.mxu0 0.0
  %1963 = vmatpush2.msra.mxu0 0.0
  %1964 = vmatprep.subr.mxu0 0.0
  %1965 = vmatpush2.msra.mxu0 0.0
  %1966 = vmatprep.subr.mxu0 0.0
  %1967 = vmatpush2.msra.mxu0 0.0
  %1968 = vmatprep.mubr.f32.mxu0 0.0
  %1969 = vmatmul.mubr.f32.gmra.mxu0 %v1902
  %v1970 = vpop.f32.mrf.mxu0
  %v1971 = vadd.f32 0.0, %v1970
  %v1972 = vpop.f32.mrf.mxu0
  %1973 = vdwg.mxu0
  %v1974 = vadd.f32 %v1376, %v1971
  %v1975 = vtanh.pop %v1974
  %v1976 = vld [vmem:[%s7] sm:$0xff]
  %v1977 = vld [vmem:[%s7 + $0x8] sm:$0xff]
  %v1978 = vld [vmem:[%s7 + $0x10] sm:$0xff]
  %v1979 = vld [vmem:[%s7 + $0x18] sm:$0xff]
  %v1980 = vld [vmem:[%s7 + $0x20] sm:$0xff]
  %v1981 = vld [vmem:[%s7 + $0x28] sm:$0xff]
  %v1982 = vld [vmem:[%s7 + $0x30] sm:$0xff]
  %v1983 = vld [vmem:[%s7 + $0x38] sm:$0xff]
  %v1984 = vld [vmem:[%s8] sm:$0x1]
  %v1986 = vlaneseq
  %v1987 = vshrl.u32 %v1986, 7
  %v1988 = vsub.s32 0, %v1987
  %v1989 = vrot.slane %v1984, %v1988
  %v1992 = vsel %vm55, %v1975, 0
  %1994 = vmatprep.subr.mxu0 0.0
  %1995 = vmatpush1.msra.mxu0 0.0
  %1996 = vmatprep.subr.mxu0 0.0
  %1997 = vmatpush1.msra.mxu0 0.0
  %1998 = vmatprep.subr.mxu0 0.0
  %1999 = vmatpush1.msra.mxu0 0.0
  %2000 = vmatprep.subr.mxu0 0.0
  %2001 = vmatpush1.msra.mxu0 0.0
  %2002 = vmatprep.subr.mxu0 0.0
  %2003 = vmatpush1.msra.mxu0 0.0
  %2004 = vmatprep.subr.mxu0 0.0
  %2005 = vmatpush1.msra.mxu0 0.0
  %2006 = vmatprep.subr.mxu0 0.0
  %2007 = vmatpush1.msra.mxu0 0.0
  %2008 = vmatprep.subr.mxu0 0.0
  %2009 = vmatpush1.msra.mxu0 0.0
  %2010 = vmatprep.subr.mxu0 0.0
  %2011 = vmatpush1.msra.mxu0 %v1983
  %2012 = vmatprep.subr.mxu0 0.0
  %2013 = vmatpush1.msra.mxu0 %v1982
  %2014 = vmatprep.subr.mxu0 0.0
  %2015 = vmatpush1.msra.mxu0 %v1981
  %2016 = vmatprep.subr.mxu0 0.0
  %2017 = vmatpush1.msra.mxu0 %v1980
  %2018 = vmatprep.subr.mxu0 0.0
  %2019 = vmatpush1.msra.mxu0 %v1979
  %2020 = vmatprep.subr.mxu0 0.0
  %2021 = vmatpush1.msra.mxu0 %v1978
  %2022 = vmatprep.subr.mxu0 0.0
  %2023 = vmatpush1.msra.mxu0 %v1977
  %2024 = vmatprep.subr.mxu0 0.0
  %2025 = vmatpush1.msra.mxu0 %v1976
  %2026 = vmatprep.subr.mxu0 0.0
  %2027 = vmatpush2.msra.mxu0 0.0
  %2028 = vmatprep.subr.mxu0 0.0
  %2029 = vmatpush2.msra.mxu0 0.0
  %2030 = vmatprep.subr.mxu0 0.0
  %2031 = vmatpush2.msra.mxu0 0.0
  %2032 = vmatprep.subr.mxu0 0.0
  %2033 = vmatpush2.msra.mxu0 0.0
  %2034 = vmatprep.subr.mxu0 0.0
  %2035 = vmatpush2.msra.mxu0 0.0
  %2036 = vmatprep.subr.mxu0 0.0
  %2037 = vmatpush2.msra.mxu0 0.0
  %2038 = vmatprep.subr.mxu0 0.0
  %2039 = vmatpush2.msra.mxu0 0.0
  %2040 = vmatprep.subr.mxu0 0.0
  %2041 = vmatpush2.msra.mxu0 0.0
  %2042 = vmatprep.subr.mxu0 0.0
  %2043 = vmatpush2.msra.mxu0 0.0
  %2044 = vmatprep.subr.mxu0 0.0
  %2045 = vmatpush2.msra.mxu0 0.0
  %2046 = vmatprep.subr.mxu0 0.0
  %2047 = vmatpush2.msra.mxu0 0.0
  %2048 = vmatprep.subr.mxu0 0.0
  %2049 = vmatpush2.msra.mxu0 0.0
  %2050 = vmatprep.subr.mxu0 0.0
  %2051 = vmatpush2.msra.mxu0 0.0
  %2052 = vmatprep.subr.mxu0 0.0
  %2053 = vmatpush2.msra.mxu0 0.0
  %2054 = vmatprep.subr.mxu0 0.0
  %2055 = vmatpush2.msra.mxu0 0.0
  %2056 = vmatprep.subr.mxu0 0.0
  %2057 = vmatpush2.msra.mxu0 0.0
  %2058 = vmatprep.mubr.f32.mxu0 0.0
  %2059 = vmatmul.mubr.f32.gmra.mxu0 %v1452
  %v2060 = vpop.f32.mrf.mxu0
  %v2061 = vadd.f32 %v1989, %v2060
  %v2062 = vpop.f32.mrf.mxu0
  %2063 = vmatprep.mubr.f32.mxu0 0.0
  %2064 = vmatmul.mubr.f32.gmra.mxu0 %v1527
  %v2065 = vpop.f32.mrf.mxu0
  %v2066 = vadd.f32 %v1989, %v2065
  %v2067 = vpop.f32.mrf.mxu0
  %2068 = vmatprep.mubr.f32.mxu0 0.0
  %2069 = vmatmul.mubr.f32.gmra.mxu0 %v1602
  %v2070 = vpop.f32.mrf.mxu0
  %v2071 = vadd.f32 %v1989, %v2070
  %v2072 = vpop.f32.mrf.mxu0
  %2073 = vmatprep.mubr.f32.mxu0 0.0
  %2074 = vmatmul.mubr.f32.gmra.mxu0 %v1677
  %v2075 = vpop.f32.mrf.mxu0
  %v2076 = vadd.f32 %v1989, %v2075
  %v2077 = vpop.f32.mrf.mxu0
  %2078 = vmatprep.mubr.f32.mxu0 0.0
  %2079 = vmatmul.mubr.f32.gmra.mxu0 %v1752
  %v2080 = vpop.f32.mrf.mxu0
  %v2081 = vadd.f32 %v1989, %v2080
  %v2082 = vpop.f32.mrf.mxu0
  %2083 = vmatprep.mubr.f32.mxu0 0.0
  %2084 = vmatmul.mubr.f32.gmra.mxu0 %v1827
  %v2085 = vpop.f32.mrf.mxu0
  %v2086 = vadd.f32 %v1989, %v2085
  %v2087 = vpop.f32.mrf.mxu0
  %2088 = vmatprep.mubr.f32.mxu0 0.0
  %2089 = vmatmul.mubr.f32.gmra.mxu0 %v1902
  %v2090 = vpop.f32.mrf.mxu0
  %v2091 = vadd.f32 %v1989, %v2090
  %v2092 = vpop.f32.mrf.mxu0
  %2093 = vmatprep.mubr.f32.mxu0 0.0
  %2094 = vmatmul.mubr.f32.gmra.mxu0 %v1992
  %v2095 = vpop.f32.mrf.mxu0
  %v2096 = vadd.f32 %v1989, %v2095
  %v2097 = vpop.f32.mrf.mxu0
  %2098 = vdwg.mxu0
  %2099 = vst [vmem:[%s9] sm:$0xff] %v2061
  %2100 = vst [vmem:[%s9 + $0x8] sm:$0xff] %v2066
  %2101 = vst [vmem:[%s9 + $0x10] sm:$0xff] %v2071
  %2102 = vst [vmem:[%s9 + $0x18] sm:$0xff] %v2076
  %2103 = vst [vmem:[%s9 + $0x20] sm:$0xff] %v2081
  %2104 = vst [vmem:[%s9 + $0x28] sm:$0xff] %v2086
  %2105 = vst [vmem:[%s9 + $0x30] sm:$0xff] %v2091
  %2106 = vst [vmem:[%s9 + $0x38] sm:$0xff] %v2096
  // Predicated region
  $region38: #{forward.1} parent=0 // pred_check
    _
  $region39: #{forward.1} parent=0 // pred_check_branch
    %2108 = sbr.rel (0) target = $region41
  $region40: #{forward.1} parent=0 // pred_region
    _
  $region41: #{forward.1} parent=0 // pred_fallthru
    _
  // Predicated region
  $region42: #{forward.1} parent=0 // pred_check
    _
  $region43: #{forward.1} parent=0 // pred_check_branch
    %2110 = sbr.rel (0) target = $region45
  $region44: #{forward.1} parent=0 // pred_region
    _
  $region45: #{forward.1} parent=0 // pred_fallthru
    _

</llo_original>
